<compile_context>
chip_gen: v7x
topology: tpu7x:2x2x1
jax: 0.10.0
libtpu: 0.0.40
codegen_flags: <defaults>
</compile_context>

<pallas_src>
import functools

import jax
import jax.numpy as jnp
from jax import lax
from jax.experimental import pallas as pl
from jax.experimental.pallas import tpu as pltpu

_INV_SQRT_2PI = 0.3989422804014327
_INV_SQRT_2 = 0.7071067811865476


def _lpmax_kernel(m_ref, v_ref, m_out_ref, v_out_ref, *, eps, num_k):
    # Block layout: (tile_bc, K, HW). K is the probabilistic-max fold axis.
    # All math is done in f32 (matches the torch reference numerics; v5e has
    # no bf16 VPU/EUP path anyway).
    mu_a = m_ref[:, 0, :].astype(jnp.float32)
    va = v_ref[:, 0, :].astype(jnp.float32)
    # sa = E[a^2], carried across fold steps so mu_a is never re-squared.
    sa = mu_a * mu_a + va

    # K is a small, static pooling extent -> unroll the sequential pairwise
    # fold (matches torch's chunk-by-chunk loop exactly).
    for k in range(1, num_k):
        mu_b = m_ref[:, k, :].astype(jnp.float32)
        vb = v_ref[:, k, :].astype(jnp.float32)

        s = jnp.maximum(va + vb, eps)
        inv = lax.rsqrt(s)                     # one EUP op, replaces sqrt+div
        vavb = s * inv                         # == sqrt(s)
        muamub = mu_a - mu_b
        muamub_p = mu_a + mu_b
        alpha = muamub * inv

        pdf = _INV_SQRT_2PI * jnp.exp(-0.5 * (alpha * alpha))  # exp(N.log_prob)
        cdf = 0.5 * (1.0 + lax.erf(alpha * _INV_SQRT_2))       # N(0,1).cdf

        t = vavb * pdf                         # shared by mu_c and vc
        mu_c = t + muamub * cdf + mu_b
        sb = mu_b * mu_b + vb
        # E[max^2]; folded form of sa*cdf + sb*(1-cdf) (+ cross term).
        e2 = muamub_p * t + sb + cdf * (sa - sb)
        vc = e2 - mu_c * mu_c                  # parity with torch: no >=0 clamp

        mu_a, va, sa = mu_c, vc, e2

    m_out_ref[...] = mu_a.astype(m_out_ref.dtype)
    v_out_ref[...] = va.astype(v_out_ref.dtype)


def _pick_tile_bc(bc, k, hw, itemsize):
    """Pick the BC tile.

    Keeps the double-buffered input blocks well inside scoped VMEM, prefers an
    exact divisor of BC (no padded partial blocks), prefers >= 2 grid blocks
    (so the parallel axis can shard across TensorCores), and caps the tile at
    256 rows: the kernel is transcendental-bound, so bigger tiles only add
    vreg spill without hiding any extra DMA latency.
    """
    hw_pad = max(128, -(-hw // 128) * 128)          # lane padding in VMEM
    k_pad = -(-k // 8) * 8                          # sublane padding in VMEM
    bytes_per_row = 2 * 2 * k_pad * hw_pad * itemsize   # (m + v) x double-buffer
    cap = max(8, (8 * 1024 * 1024) // bytes_per_row)
    cap = min(cap, 256)

    if bc <= cap:
        if bc >= 16 and bc % 2 == 0:
            return bc // 2                          # 2 blocks -> megacore-able
        return bc                                   # single full block
    # Largest multiple-of-8 divisor of BC within the cap -> no partial blocks.
    best = 0
    for t in range(8, cap + 1, 8):
        if bc % t == 0:
            best = t
    if best:
        return best
    return cap  # no nice divisor: cdiv grid with one padded trailing block


def lp_max_layer(m, v, eps=1e-10):
    """Pallas implementation of LPMaxLayer.forward on (m, v) of shape (B,C,K,H,W).

    Returns (m_out, v_out) of shape (B, C, H, W) in the input dtype.
    """
    assert m.shape == v.shape
    B, C, K, H, W = m.shape
    BC = B * C
    HW = H * W

    # Free reshapes only (K stays in place) -> no HBM transpose, no host cast.
    m3 = m.reshape(BC, K, HW)
    v3 = v.reshape(BC, K, HW)

    tile_bc = _pick_tile_bc(BC, K, HW, jnp.dtype(m.dtype).itemsize)
    grid = (pl.cdiv(BC, tile_bc),)

    kernel = functools.partial(_lpmax_kernel, eps=float(eps), num_k=K)

    m_out, v_out = pl.pallas_call(
        kernel,
        out_shape=(
            jax.ShapeDtypeStruct((BC, HW), m.dtype),
            jax.ShapeDtypeStruct((BC, HW), v.dtype),
        ),
        grid_spec=pltpu.PrefetchScalarGridSpec(
            num_scalar_prefetch=0,
            grid=grid,
            in_specs=[
                pl.BlockSpec((tile_bc, K, HW), lambda i: (i, 0, 0)),
                pl.BlockSpec((tile_bc, K, HW), lambda i: (i, 0, 0)),
            ],
            out_specs=(
                pl.BlockSpec((tile_bc, HW), lambda i: (i, 0)),
                pl.BlockSpec((tile_bc, HW), lambda i: (i, 0)),
            ),
        ),
        compiler_params=pltpu.CompilerParams(
            dimension_semantics=("parallel",),
            vmem_limit_bytes=32 * 1024 * 1024,
        ),
    )(m3, v3)

    return m_out.reshape(B, C, H, W), v_out.reshape(B, C, H, W)


# -------- pure-JAX reference (for correctness check only) --------
def _ab_max_ref(mv1, mv2, eps=1e-10):
    mu_a, va = mv1
    mu_b, vb = mv2
    vavb = jnp.sqrt(jnp.maximum(va + vb, eps))
    muamub = mu_a - mu_b
    muamub_p = mu_a + mu_b
    alpha = muamub / vavb
    pdf = _INV_SQRT_2PI * jnp.exp(-0.5 * alpha * alpha)
    cdf = 0.5 * (1.0 + lax.erf(alpha * _INV_SQRT_2))
    mu_c = vavb * pdf + muamub * cdf + mu_b
    vc = muamub_p * vavb * pdf
    vc = vc + (mu_a**2 + va) * cdf + (mu_b**2 + vb) * (1.0 - cdf) - mu_c**2
    return mu_c, vc


def lp_max_ref(m, v, eps=1e-10):
    K = m.shape[2]
    m_a, v_a = m[:, :, 0], v[:, :, 0]
    for k in range(1, K):
        m_a, v_a = _ab_max_ref((m_a, v_a), (m[:, :, k], v[:, :, k]), eps)
    return m_a, v_a


# TODO(synk): the torch reference's `assert torch.isfinite(vavb).all()` host-side
# check has no in-kernel equivalent and is omitted.

if __name__ == "__main__":
    key = jax.random.PRNGKey(0)
    k1, k2 = jax.random.split(key)

    B, C, K, H, W = 2, 4, 8, 8, 8
    m = jax.random.normal(k1, (B, C, K, H, W), dtype=jnp.float32)
    # variances must be non-negative
    v = jnp.abs(jax.random.normal(k2, (B, C, K, H, W), dtype=jnp.float32)) + 0.1

    m_out, v_out = lp_max_layer(m, v)
    jax.block_until_ready((m_out, v_out))

    m_ref, v_ref = lp_max_ref(m, v)
    assert m_out.shape == (B, C, H, W) and v_out.shape == (B, C, H, W)
    assert jnp.allclose(m_out, m_ref, atol=1e-5, rtol=1e-4)
    assert jnp.allclose(v_out, v_ref, atol=1e-5, rtol=1e-4)

    print("KERNEL_OK")
</pallas_src>

<mosaic_0001>
module attributes {stable_mosaic.version = 11 : i64} {
  func.func @_lpmax_kernel(%arg0: i32, %arg1: memref<8x8x64xf32, #tpu.memory_space<vmem>>, %arg2: memref<8x8x64xf32, #tpu.memory_space<vmem>>, %arg3: memref<8x64xf32, #tpu.memory_space<vmem>>, %arg4: memref<8x64xf32, #tpu.memory_space<vmem>>) attributes {dimension_semantics = [#tpu.dimension_semantics<parallel>], iteration_bounds = array<i64: 1>, scalar_prefetch = 0 : i64, scratch_operands = 0 : i64, tpu.core_type = #tpu.core_type<tc>, window_params = [{transform_indices = @transform_0, window_bounds = array<i64: 8, 8, 64>}, {transform_indices = @transform_1, window_bounds = array<i64: 8, 8, 64>}, {transform_indices = @transform_2, window_bounds = array<i64: 8, 64>}, {transform_indices = @transform_3, window_bounds = array<i64: 8, 64>}]} {
    %c0 = arith.constant 0 : index
    %c0_0 = arith.constant 0 : index
    %c0_1 = arith.constant 0 : index
    %0 = vector.load %arg1[%c0, %c0_0, %c0_1] : memref<8x8x64xf32, #tpu.memory_space<vmem>>, vector<8x1x64xf32>
    %1 = vector.shape_cast %0 : vector<8x1x64xf32> to vector<8x64xf32>
    %c0_2 = arith.constant 0 : index
    %c0_3 = arith.constant 0 : index
    %c0_4 = arith.constant 0 : index
    %2 = vector.load %arg2[%c0_2, %c0_3, %c0_4] : memref<8x8x64xf32, #tpu.memory_space<vmem>>, vector<8x1x64xf32>
    %3 = vector.shape_cast %2 : vector<8x1x64xf32> to vector<8x64xf32>
    %4 = arith.mulf %1, %1 : vector<8x64xf32>
    %5 = arith.addf %4, %3 : vector<8x64xf32>
    %c0_5 = arith.constant 0 : index
    %c1 = arith.constant 1 : index
    %c0_6 = arith.constant 0 : index
    %6 = vector.load %arg1[%c0_5, %c1, %c0_6] : memref<8x8x64xf32, #tpu.memory_space<vmem>>, vector<8x1x64xf32>
    %7 = vector.shape_cast %6 : vector<8x1x64xf32> to vector<8x64xf32>
    %c0_7 = arith.constant 0 : index
    %c1_8 = arith.constant 1 : index
    %c0_9 = arith.constant 0 : index
    %8 = vector.load %arg2[%c0_7, %c1_8, %c0_9] : memref<8x8x64xf32, #tpu.memory_space<vmem>>, vector<8x1x64xf32>
    %9 = vector.shape_cast %8 : vector<8x1x64xf32> to vector<8x64xf32>
    %10 = arith.addf %3, %9 : vector<8x64xf32>
    %cst = arith.constant 1.000000e-10 : f32
    %11 = vector.broadcast %cst : f32 to vector<8x64xf32>
    %12 = arith.maximumf %10, %11 : vector<8x64xf32>
    %13 = math.rsqrt %12 : vector<8x64xf32>
    %14 = arith.mulf %12, %13 : vector<8x64xf32>
    %15 = arith.subf %1, %7 : vector<8x64xf32>
    %16 = arith.addf %1, %7 : vector<8x64xf32>
    %17 = arith.mulf %15, %13 : vector<8x64xf32>
    %18 = arith.mulf %17, %17 : vector<8x64xf32>
    %cst_10 = arith.constant -5.000000e-01 : f32
    %19 = vector.broadcast %cst_10 : f32 to vector<8x64xf32>
    %20 = arith.mulf %19, %18 : vector<8x64xf32>
    %21 = math.exp %20 : vector<8x64xf32>
    %cst_11 = arith.constant 0.398942292 : f32
    %22 = vector.broadcast %cst_11 : f32 to vector<8x64xf32>
    %23 = arith.mulf %22, %21 : vector<8x64xf32>
    %cst_12 = arith.constant 0.707106769 : f32
    %24 = vector.broadcast %cst_12 : f32 to vector<8x64xf32>
    %25 = arith.mulf %17, %24 : vector<8x64xf32>
    %26 = math.erf %25 : vector<8x64xf32>
    %cst_13 = arith.constant 1.000000e+00 : f32
    %27 = vector.broadcast %cst_13 : f32 to vector<8x64xf32>
    %28 = arith.addf %27, %26 : vector<8x64xf32>
    %cst_14 = arith.constant 5.000000e-01 : f32
    %29 = vector.broadcast %cst_14 : f32 to vector<8x64xf32>
    %30 = arith.mulf %29, %28 : vector<8x64xf32>
    %31 = arith.mulf %14, %23 : vector<8x64xf32>
    %32 = arith.mulf %15, %30 : vector<8x64xf32>
    %33 = arith.addf %31, %32 : vector<8x64xf32>
    %34 = arith.addf %33, %7 : vector<8x64xf32>
    %35 = arith.mulf %7, %7 : vector<8x64xf32>
    %36 = arith.addf %35, %9 : vector<8x64xf32>
    %37 = arith.mulf %16, %31 : vector<8x64xf32>
    %38 = arith.addf %37, %36 : vector<8x64xf32>
    %39 = arith.subf %5, %36 : vector<8x64xf32>
    %40 = arith.mulf %30, %39 : vector<8x64xf32>
    %41 = arith.addf %38, %40 : vector<8x64xf32>
    %42 = arith.mulf %34, %34 : vector<8x64xf32>
    %43 = arith.subf %41, %42 : vector<8x64xf32>
    %c0_15 = arith.constant 0 : index
    %c2 = arith.constant 2 : index
    %c0_16 = arith.constant 0 : index
    %44 = vector.load %arg1[%c0_15, %c2, %c0_16] : memref<8x8x64xf32, #tpu.memory_space<vmem>>, vector<8x1x64xf32>
    %45 = vector.shape_cast %44 : vector<8x1x64xf32> to vector<8x64xf32>
    %c0_17 = arith.constant 0 : index
    %c2_18 = arith.constant 2 : index
    %c0_19 = arith.constant 0 : index
    %46 = vector.load %arg2[%c0_17, %c2_18, %c0_19] : memref<8x8x64xf32, #tpu.memory_space<vmem>>, vector<8x1x64xf32>
    %47 = vector.shape_cast %46 : vector<8x1x64xf32> to vector<8x64xf32>
    %48 = arith.addf %43, %47 : vector<8x64xf32>
    %cst_20 = arith.constant 1.000000e-10 : f32
    %49 = vector.broadcast %cst_20 : f32 to vector<8x64xf32>
    %50 = arith.maximumf %48, %49 : vector<8x64xf32>
    %51 = math.rsqrt %50 : vector<8x64xf32>
    %52 = arith.mulf %50, %51 : vector<8x64xf32>
    %53 = arith.subf %34, %45 : vector<8x64xf32>
    %54 = arith.addf %34, %45 : vector<8x64xf32>
    %55 = arith.mulf %53, %51 : vector<8x64xf32>
    %56 = arith.mulf %55, %55 : vector<8x64xf32>
    %cst_21 = arith.constant -5.000000e-01 : f32
    %57 = vector.broadcast %cst_21 : f32 to vector<8x64xf32>
    %58 = arith.mulf %57, %56 : vector<8x64xf32>
    %59 = math.exp %58 : vector<8x64xf32>
    %cst_22 = arith.constant 0.398942292 : f32
    %60 = vector.broadcast %cst_22 : f32 to vector<8x64xf32>
    %61 = arith.mulf %60, %59 : vector<8x64xf32>
    %cst_23 = arith.constant 0.707106769 : f32
    %62 = vector.broadcast %cst_23 : f32 to vector<8x64xf32>
    %63 = arith.mulf %55, %62 : vector<8x64xf32>
    %64 = math.erf %63 : vector<8x64xf32>
    %cst_24 = arith.constant 1.000000e+00 : f32
    %65 = vector.broadcast %cst_24 : f32 to vector<8x64xf32>
    %66 = arith.addf %65, %64 : vector<8x64xf32>
    %cst_25 = arith.constant 5.000000e-01 : f32
    %67 = vector.broadcast %cst_25 : f32 to vector<8x64xf32>
    %68 = arith.mulf %67, %66 : vector<8x64xf32>
    %69 = arith.mulf %52, %61 : vector<8x64xf32>
    %70 = arith.mulf %53, %68 : vector<8x64xf32>
    %71 = arith.addf %69, %70 : vector<8x64xf32>
    %72 = arith.addf %71, %45 : vector<8x64xf32>
    %73 = arith.mulf %45, %45 : vector<8x64xf32>
    %74 = arith.addf %73, %47 : vector<8x64xf32>
    %75 = arith.mulf %54, %69 : vector<8x64xf32>
    %76 = arith.addf %75, %74 : vector<8x64xf32>
    %77 = arith.subf %41, %74 : vector<8x64xf32>
    %78 = arith.mulf %68, %77 : vector<8x64xf32>
    %79 = arith.addf %76, %78 : vector<8x64xf32>
    %80 = arith.mulf %72, %72 : vector<8x64xf32>
    %81 = arith.subf %79, %80 : vector<8x64xf32>
    %c0_26 = arith.constant 0 : index
    %c3 = arith.constant 3 : index
    %c0_27 = arith.constant 0 : index
    %82 = vector.load %arg1[%c0_26, %c3, %c0_27] : memref<8x8x64xf32, #tpu.memory_space<vmem>>, vector<8x1x64xf32>
    %83 = vector.shape_cast %82 : vector<8x1x64xf32> to vector<8x64xf32>
    %c0_28 = arith.constant 0 : index
    %c3_29 = arith.constant 3 : index
    %c0_30 = arith.constant 0 : index
    %84 = vector.load %arg2[%c0_28, %c3_29, %c0_30] : memref<8x8x64xf32, #tpu.memory_space<vmem>>, vector<8x1x64xf32>
    %85 = vector.shape_cast %84 : vector<8x1x64xf32> to vector<8x64xf32>
    %86 = arith.addf %81, %85 : vector<8x64xf32>
    %cst_31 = arith.constant 1.000000e-10 : f32
    %87 = vector.broadcast %cst_31 : f32 to vector<8x64xf32>
    %88 = arith.maximumf %86, %87 : vector<8x64xf32>
    %89 = math.rsqrt %88 : vector<8x64xf32>
    %90 = arith.mulf %88, %89 : vector<8x64xf32>
    %91 = arith.subf %72, %83 : vector<8x64xf32>
    %92 = arith.addf %72, %83 : vector<8x64xf32>
    %93 = arith.mulf %91, %89 : vector<8x64xf32>
    %94 = arith.mulf %93, %93 : vector<8x64xf32>
    %cst_32 = arith.constant -5.000000e-01 : f32
    %95 = vector.broadcast %cst_32 : f32 to vector<8x64xf32>
    %96 = arith.mulf %95, %94 : vector<8x64xf32>
    %97 = math.exp %96 : vector<8x64xf32>
    %cst_33 = arith.constant 0.398942292 : f32
    %98 = vector.broadcast %cst_33 : f32 to vector<8x64xf32>
    %99 = arith.mulf %98, %97 : vector<8x64xf32>
    %cst_34 = arith.constant 0.707106769 : f32
    %100 = vector.broadcast %cst_34 : f32 to vector<8x64xf32>
    %101 = arith.mulf %93, %100 : vector<8x64xf32>
    %102 = math.erf %101 : vector<8x64xf32>
    %cst_35 = arith.constant 1.000000e+00 : f32
    %103 = vector.broadcast %cst_35 : f32 to vector<8x64xf32>
    %104 = arith.addf %103, %102 : vector<8x64xf32>
    %cst_36 = arith.constant 5.000000e-01 : f32
    %105 = vector.broadcast %cst_36 : f32 to vector<8x64xf32>
    %106 = arith.mulf %105, %104 : vector<8x64xf32>
    %107 = arith.mulf %90, %99 : vector<8x64xf32>
    %108 = arith.mulf %91, %106 : vector<8x64xf32>
    %109 = arith.addf %107, %108 : vector<8x64xf32>
    %110 = arith.addf %109, %83 : vector<8x64xf32>
    %111 = arith.mulf %83, %83 : vector<8x64xf32>
    %112 = arith.addf %111, %85 : vector<8x64xf32>
    %113 = arith.mulf %92, %107 : vector<8x64xf32>
    %114 = arith.addf %113, %112 : vector<8x64xf32>
    %115 = arith.subf %79, %112 : vector<8x64xf32>
    %116 = arith.mulf %106, %115 : vector<8x64xf32>
    %117 = arith.addf %114, %116 : vector<8x64xf32>
    %118 = arith.mulf %110, %110 : vector<8x64xf32>
    %119 = arith.subf %117, %118 : vector<8x64xf32>
    %c0_37 = arith.constant 0 : index
    %c4 = arith.constant 4 : index
    %c0_38 = arith.constant 0 : index
    %120 = vector.load %arg1[%c0_37, %c4, %c0_38] : memref<8x8x64xf32, #tpu.memory_space<vmem>>, vector<8x1x64xf32>
    %121 = vector.shape_cast %120 : vector<8x1x64xf32> to vector<8x64xf32>
    %c0_39 = arith.constant 0 : index
    %c4_40 = arith.constant 4 : index
    %c0_41 = arith.constant 0 : index
    %122 = vector.load %arg2[%c0_39, %c4_40, %c0_41] : memref<8x8x64xf32, #tpu.memory_space<vmem>>, vector<8x1x64xf32>
    %123 = vector.shape_cast %122 : vector<8x1x64xf32> to vector<8x64xf32>
    %124 = arith.addf %119, %123 : vector<8x64xf32>
    %cst_42 = arith.constant 1.000000e-10 : f32
    %125 = vector.broadcast %cst_42 : f32 to vector<8x64xf32>
    %126 = arith.maximumf %124, %125 : vector<8x64xf32>
    %127 = math.rsqrt %126 : vector<8x64xf32>
    %128 = arith.mulf %126, %127 : vector<8x64xf32>
    %129 = arith.subf %110, %121 : vector<8x64xf32>
    %130 = arith.addf %110, %121 : vector<8x64xf32>
    %131 = arith.mulf %129, %127 : vector<8x64xf32>
    %132 = arith.mulf %131, %131 : vector<8x64xf32>
    %cst_43 = arith.constant -5.000000e-01 : f32
    %133 = vector.broadcast %cst_43 : f32 to vector<8x64xf32>
    %134 = arith.mulf %133, %132 : vector<8x64xf32>
    %135 = math.exp %134 : vector<8x64xf32>
    %cst_44 = arith.constant 0.398942292 : f32
    %136 = vector.broadcast %cst_44 : f32 to vector<8x64xf32>
    %137 = arith.mulf %136, %135 : vector<8x64xf32>
    %cst_45 = arith.constant 0.707106769 : f32
    %138 = vector.broadcast %cst_45 : f32 to vector<8x64xf32>
    %139 = arith.mulf %131, %138 : vector<8x64xf32>
    %140 = math.erf %139 : vector<8x64xf32>
    %cst_46 = arith.constant 1.000000e+00 : f32
    %141 = vector.broadcast %cst_46 : f32 to vector<8x64xf32>
    %142 = arith.addf %141, %140 : vector<8x64xf32>
    %cst_47 = arith.constant 5.000000e-01 : f32
    %143 = vector.broadcast %cst_47 : f32 to vector<8x64xf32>
    %144 = arith.mulf %143, %142 : vector<8x64xf32>
    %145 = arith.mulf %128, %137 : vector<8x64xf32>
    %146 = arith.mulf %129, %144 : vector<8x64xf32>
    %147 = arith.addf %145, %146 : vector<8x64xf32>
    %148 = arith.addf %147, %121 : vector<8x64xf32>
    %149 = arith.mulf %121, %121 : vector<8x64xf32>
    %150 = arith.addf %149, %123 : vector<8x64xf32>
    %151 = arith.mulf %130, %145 : vector<8x64xf32>
    %152 = arith.addf %151, %150 : vector<8x64xf32>
    %153 = arith.subf %117, %150 : vector<8x64xf32>
    %154 = arith.mulf %144, %153 : vector<8x64xf32>
    %155 = arith.addf %152, %154 : vector<8x64xf32>
    %156 = arith.mulf %148, %148 : vector<8x64xf32>
    %157 = arith.subf %155, %156 : vector<8x64xf32>
    %c0_48 = arith.constant 0 : index
    %c5 = arith.constant 5 : index
    %c0_49 = arith.constant 0 : index
    %158 = vector.load %arg1[%c0_48, %c5, %c0_49] : memref<8x8x64xf32, #tpu.memory_space<vmem>>, vector<8x1x64xf32>
    %159 = vector.shape_cast %158 : vector<8x1x64xf32> to vector<8x64xf32>
    %c0_50 = arith.constant 0 : index
    %c5_51 = arith.constant 5 : index
    %c0_52 = arith.constant 0 : index
    %160 = vector.load %arg2[%c0_50, %c5_51, %c0_52] : memref<8x8x64xf32, #tpu.memory_space<vmem>>, vector<8x1x64xf32>
    %161 = vector.shape_cast %160 : vector<8x1x64xf32> to vector<8x64xf32>
    %162 = arith.addf %157, %161 : vector<8x64xf32>
    %cst_53 = arith.constant 1.000000e-10 : f32
    %163 = vector.broadcast %cst_53 : f32 to vector<8x64xf32>
    %164 = arith.maximumf %162, %163 : vector<8x64xf32>
    %165 = math.rsqrt %164 : vector<8x64xf32>
    %166 = arith.mulf %164, %165 : vector<8x64xf32>
    %167 = arith.subf %148, %159 : vector<8x64xf32>
    %168 = arith.addf %148, %159 : vector<8x64xf32>
    %169 = arith.mulf %167, %165 : vector<8x64xf32>
    %170 = arith.mulf %169, %169 : vector<8x64xf32>
    %cst_54 = arith.constant -5.000000e-01 : f32
    %171 = vector.broadcast %cst_54 : f32 to vector<8x64xf32>
    %172 = arith.mulf %171, %170 : vector<8x64xf32>
    %173 = math.exp %172 : vector<8x64xf32>
    %cst_55 = arith.constant 0.398942292 : f32
    %174 = vector.broadcast %cst_55 : f32 to vector<8x64xf32>
    %175 = arith.mulf %174, %173 : vector<8x64xf32>
    %cst_56 = arith.constant 0.707106769 : f32
    %176 = vector.broadcast %cst_56 : f32 to vector<8x64xf32>
    %177 = arith.mulf %169, %176 : vector<8x64xf32>
    %178 = math.erf %177 : vector<8x64xf32>
    %cst_57 = arith.constant 1.000000e+00 : f32
    %179 = vector.broadcast %cst_57 : f32 to vector<8x64xf32>
    %180 = arith.addf %179, %178 : vector<8x64xf32>
    %cst_58 = arith.constant 5.000000e-01 : f32
    %181 = vector.broadcast %cst_58 : f32 to vector<8x64xf32>
    %182 = arith.mulf %181, %180 : vector<8x64xf32>
    %183 = arith.mulf %166, %175 : vector<8x64xf32>
    %184 = arith.mulf %167, %182 : vector<8x64xf32>
    %185 = arith.addf %183, %184 : vector<8x64xf32>
    %186 = arith.addf %185, %159 : vector<8x64xf32>
    %187 = arith.mulf %159, %159 : vector<8x64xf32>
    %188 = arith.addf %187, %161 : vector<8x64xf32>
    %189 = arith.mulf %168, %183 : vector<8x64xf32>
    %190 = arith.addf %189, %188 : vector<8x64xf32>
    %191 = arith.subf %155, %188 : vector<8x64xf32>
    %192 = arith.mulf %182, %191 : vector<8x64xf32>
    %193 = arith.addf %190, %192 : vector<8x64xf32>
    %194 = arith.mulf %186, %186 : vector<8x64xf32>
    %195 = arith.subf %193, %194 : vector<8x64xf32>
    %c0_59 = arith.constant 0 : index
    %c6 = arith.constant 6 : index
    %c0_60 = arith.constant 0 : index
    %196 = vector.load %arg1[%c0_59, %c6, %c0_60] : memref<8x8x64xf32, #tpu.memory_space<vmem>>, vector<8x1x64xf32>
    %197 = vector.shape_cast %196 : vector<8x1x64xf32> to vector<8x64xf32>
    %c0_61 = arith.constant 0 : index
    %c6_62 = arith.constant 6 : index
    %c0_63 = arith.constant 0 : index
    %198 = vector.load %arg2[%c0_61, %c6_62, %c0_63] : memref<8x8x64xf32, #tpu.memory_space<vmem>>, vector<8x1x64xf32>
    %199 = vector.shape_cast %198 : vector<8x1x64xf32> to vector<8x64xf32>
    %200 = arith.addf %195, %199 : vector<8x64xf32>
    %cst_64 = arith.constant 1.000000e-10 : f32
    %201 = vector.broadcast %cst_64 : f32 to vector<8x64xf32>
    %202 = arith.maximumf %200, %201 : vector<8x64xf32>
    %203 = math.rsqrt %202 : vector<8x64xf32>
    %204 = arith.mulf %202, %203 : vector<8x64xf32>
    %205 = arith.subf %186, %197 : vector<8x64xf32>
    %206 = arith.addf %186, %197 : vector<8x64xf32>
    %207 = arith.mulf %205, %203 : vector<8x64xf32>
    %208 = arith.mulf %207, %207 : vector<8x64xf32>
    %cst_65 = arith.constant -5.000000e-01 : f32
    %209 = vector.broadcast %cst_65 : f32 to vector<8x64xf32>
    %210 = arith.mulf %209, %208 : vector<8x64xf32>
    %211 = math.exp %210 : vector<8x64xf32>
    %cst_66 = arith.constant 0.398942292 : f32
    %212 = vector.broadcast %cst_66 : f32 to vector<8x64xf32>
    %213 = arith.mulf %212, %211 : vector<8x64xf32>
    %cst_67 = arith.constant 0.707106769 : f32
    %214 = vector.broadcast %cst_67 : f32 to vector<8x64xf32>
    %215 = arith.mulf %207, %214 : vector<8x64xf32>
    %216 = math.erf %215 : vector<8x64xf32>
    %cst_68 = arith.constant 1.000000e+00 : f32
    %217 = vector.broadcast %cst_68 : f32 to vector<8x64xf32>
    %218 = arith.addf %217, %216 : vector<8x64xf32>
    %cst_69 = arith.constant 5.000000e-01 : f32
    %219 = vector.broadcast %cst_69 : f32 to vector<8x64xf32>
    %220 = arith.mulf %219, %218 : vector<8x64xf32>
    %221 = arith.mulf %204, %213 : vector<8x64xf32>
    %222 = arith.mulf %205, %220 : vector<8x64xf32>
    %223 = arith.addf %221, %222 : vector<8x64xf32>
    %224 = arith.addf %223, %197 : vector<8x64xf32>
    %225 = arith.mulf %197, %197 : vector<8x64xf32>
    %226 = arith.addf %225, %199 : vector<8x64xf32>
    %227 = arith.mulf %206, %221 : vector<8x64xf32>
    %228 = arith.addf %227, %226 : vector<8x64xf32>
    %229 = arith.subf %193, %226 : vector<8x64xf32>
    %230 = arith.mulf %220, %229 : vector<8x64xf32>
    %231 = arith.addf %228, %230 : vector<8x64xf32>
    %232 = arith.mulf %224, %224 : vector<8x64xf32>
    %233 = arith.subf %231, %232 : vector<8x64xf32>
    %c0_70 = arith.constant 0 : index
    %c7 = arith.constant 7 : index
    %c0_71 = arith.constant 0 : index
    %234 = vector.load %arg1[%c0_70, %c7, %c0_71] : memref<8x8x64xf32, #tpu.memory_space<vmem>>, vector<8x1x64xf32>
    %235 = vector.shape_cast %234 : vector<8x1x64xf32> to vector<8x64xf32>
    %c0_72 = arith.constant 0 : index
    %c7_73 = arith.constant 7 : index
    %c0_74 = arith.constant 0 : index
    %236 = vector.load %arg2[%c0_72, %c7_73, %c0_74] : memref<8x8x64xf32, #tpu.memory_space<vmem>>, vector<8x1x64xf32>
    %237 = vector.shape_cast %236 : vector<8x1x64xf32> to vector<8x64xf32>
    %238 = arith.addf %233, %237 : vector<8x64xf32>
    %cst_75 = arith.constant 1.000000e-10 : f32
    %239 = vector.broadcast %cst_75 : f32 to vector<8x64xf32>
    %240 = arith.maximumf %238, %239 : vector<8x64xf32>
    %241 = math.rsqrt %240 : vector<8x64xf32>
    %242 = arith.mulf %240, %241 : vector<8x64xf32>
    %243 = arith.subf %224, %235 : vector<8x64xf32>
    %244 = arith.addf %224, %235 : vector<8x64xf32>
    %245 = arith.mulf %243, %241 : vector<8x64xf32>
    %246 = arith.mulf %245, %245 : vector<8x64xf32>
    %cst_76 = arith.constant -5.000000e-01 : f32
    %247 = vector.broadcast %cst_76 : f32 to vector<8x64xf32>
    %248 = arith.mulf %247, %246 : vector<8x64xf32>
    %249 = math.exp %248 : vector<8x64xf32>
    %cst_77 = arith.constant 0.398942292 : f32
    %250 = vector.broadcast %cst_77 : f32 to vector<8x64xf32>
    %251 = arith.mulf %250, %249 : vector<8x64xf32>
    %cst_78 = arith.constant 0.707106769 : f32
    %252 = vector.broadcast %cst_78 : f32 to vector<8x64xf32>
    %253 = arith.mulf %245, %252 : vector<8x64xf32>
    %254 = math.erf %253 : vector<8x64xf32>
    %cst_79 = arith.constant 1.000000e+00 : f32
    %255 = vector.broadcast %cst_79 : f32 to vector<8x64xf32>
    %256 = arith.addf %255, %254 : vector<8x64xf32>
    %cst_80 = arith.constant 5.000000e-01 : f32
    %257 = vector.broadcast %cst_80 : f32 to vector<8x64xf32>
    %258 = arith.mulf %257, %256 : vector<8x64xf32>
    %259 = arith.mulf %242, %251 : vector<8x64xf32>
    %260 = arith.mulf %243, %258 : vector<8x64xf32>
    %261 = arith.addf %259, %260 : vector<8x64xf32>
    %262 = arith.addf %261, %235 : vector<8x64xf32>
    %263 = arith.mulf %235, %235 : vector<8x64xf32>
    %264 = arith.addf %263, %237 : vector<8x64xf32>
    %265 = arith.mulf %244, %259 : vector<8x64xf32>
    %266 = arith.addf %265, %264 : vector<8x64xf32>
    %267 = arith.subf %231, %264 : vector<8x64xf32>
    %268 = arith.mulf %258, %267 : vector<8x64xf32>
    %269 = arith.addf %266, %268 : vector<8x64xf32>
    %270 = arith.mulf %262, %262 : vector<8x64xf32>
    %271 = arith.subf %269, %270 : vector<8x64xf32>
    %c0_81 = arith.constant 0 : index
    %c0_82 = arith.constant 0 : index
    %272 = vector.load %arg3[%c0_81, %c0_82] : memref<8x64xf32, #tpu.memory_space<vmem>>, vector<8x64xf32>
    tpu.vector_store %arg3[%c0_81, %c0_82], %262 {strides = array<i32>} : memref<8x64xf32, #tpu.memory_space<vmem>>, vector<8x64xf32>,
    %c0_83 = arith.constant 0 : index
    %c0_84 = arith.constant 0 : index
    %273 = vector.load %arg4[%c0_83, %c0_84] : memref<8x64xf32, #tpu.memory_space<vmem>>, vector<8x64xf32>
    tpu.vector_store %arg4[%c0_83, %c0_84], %271 {strides = array<i32>} : memref<8x64xf32, #tpu.memory_space<vmem>>, vector<8x64xf32>,
    return
  }
  func.func @transform_0(%arg0: i32) -> (i32, i32, i32) {
    %c0_i32 = arith.constant 0 : i32
    %c0_i32_0 = arith.constant 0 : i32
    %c0_i32_1 = arith.constant 0 : i32
    return %arg0, %c0_i32, %c0_i32_0 : i32, i32, i32
  }
  func.func @transform_1(%arg0: i32) -> (i32, i32, i32) {
    %c0_i32 = arith.constant 0 : i32
    %c0_i32_0 = arith.constant 0 : i32
    %c0_i32_1 = arith.constant 0 : i32
    return %arg0, %c0_i32, %c0_i32_0 : i32, i32, i32
  }
  func.func @transform_2(%arg0: i32) -> (i32, i32) {
    %c0_i32 = arith.constant 0 : i32
    %c0_i32_0 = arith.constant 0 : i32
    return %arg0, %c0_i32 : i32, i32
  }
  func.func @transform_3(%arg0: i32) -> (i32, i32) {
    %c0_i32 = arith.constant 0 : i32
    %c0_i32_0 = arith.constant 0 : i32
    return %arg0, %c0_i32 : i32, i32
  }
}

</mosaic_0001>

<llo_original>
// kernel: tpu_custom_call.1
$region0: #{tpu_custom_call.1}
  #allocation0 [shape = 'u32[]', space=smem, size = 0x4, offset = 0x4, fixed_abs, tag = 'smem constant byte address 0x4 - core index']
  #allocation1 [shape = 'u32[144,128]{1,0:T(1,128)}', space=vmem, size = 0x12000, scoped, tag = 'internal scratch']
  %s0 = inlined_call_operand.hbm [shape: f32[8,8,64], index: 0, kind: input, shape index: {}]
  %s1 = inlined_call_operand.hbm [shape: f32[8,8,64], index: 1, kind: input, shape index: {}]
  %s2 = inlined_call_operand.hbm [shape: f32[8,64], index: 2, kind: output, shape index: {0}]
  %s3 = inlined_call_operand.hbm [shape: f32[8,64], index: 3, kind: output, shape index: {1}]
  %4 = xla_tuple %s2, %s3
  %s5 = sld [smem:[#allocation0]]
  $region34: #{tpu_custom_call.1} parent=0
    _
  %s7 = ssub.s32 1, %s5
  %s8 = scalar_select 0, %s7, %s5
  $region1: #{tpu_custom_call.1} parent=0
    #allocation2 [shape = 'u8[32768]{0}', space=vmem, size = 0x8000, scoped, tag = 'input window, operand 0, single buffered']
    #allocation3 [shape = 's32[1]{0}', space=sflag, size = 0x4, scoped, tag = 'scoped memory for tpu_custom_call.1']
    #allocation4 [shape = 's32[1]{0}', space=sflag, size = 0x4, scoped, tag = 'scoped memory for tpu_custom_call.1']
    #allocation5 [shape = 'u8[32768]{0}', space=vmem, size = 0x8000, scoped, tag = 'input window, operand 1, single buffered']
    #allocation6 [shape = 's32[1]{0}', space=sflag, size = 0x4, scoped, tag = 'scoped memory for tpu_custom_call.1']
    #allocation7 [shape = 'u8[4096]{0}', space=vmem, size = 0x1000, scoped, tag = 'output window, operand 0, single buffered']
    #allocation8 [shape = 'u8[4096]{0}', space=vmem, size = 0x1000, scoped, tag = 'output window, operand 1, single buffered']
    #allocation9 [shape = 's32[1]{0}', space=sflag, size = 0x4, scoped, tag = 'scoped memory for tpu_custom_call.1']
    %9 = vsyncpa [#allocation3], 0
    %10 = vsyncpa [#allocation6], 0
    %11 = vsyncpa [#allocation4], 0
    %12 = vsyncpa [#allocation9], 0
    // Predicated region
    $region2: #{tpu_custom_call.1} parent=1 // pred_check
      _
    $region3: #{tpu_custom_call.1} parent=1 // pred_check_branch
      %14 = sbr.rel (0) target = $region5
    $region4: #{tpu_custom_call.1} parent=1 // pred_region
      %s16 = ssub.s32 1024, 1024
      %17 = vsyncadd [#allocation3], %s16
      %s18 = sshll.u32 [#allocation2], 4
      %s19 = int_to_ptr.vmem [resolvable:$true] %s18
      %24 = dma.hbm_to_vmem [thread:$0]  %s0, 1024, %s19, [#allocation3], 128, 128, 8
    $region5: #{tpu_custom_call.1} parent=1 // pred_fallthru
      _
    // Predicated region
    $region6: #{tpu_custom_call.1} parent=1 // pred_check
      _
    $region7: #{tpu_custom_call.1} parent=1 // pred_check_branch
      %26 = sbr.rel (0) target = $region9
    $region8: #{tpu_custom_call.1} parent=1 // pred_region
      %s28 = ssub.s32 1024, 1024
      %29 = vsyncadd [#allocation6], %s28
      %s30 = sshll.u32 [#allocation5], 4
      %s31 = int_to_ptr.vmem [resolvable:$true] %s30
      %36 = dma.hbm_to_vmem [thread:$0]  %s1, 1024, %s31, [#allocation6], 128, 128, 8
    $region9: #{tpu_custom_call.1} parent=1 // pred_fallthru
      _
    // Predicated region
    $region10: #{tpu_custom_call.1} parent=1 // pred_check
      _
    $region11: #{tpu_custom_call.1} parent=1 // pred_check_branch
      %38 = sbr.rel (0) target = $region13
    $region12: #{tpu_custom_call.1} parent=1 // pred_region
      %39 = dma.done [#allocation3], 1024
    $region13: #{tpu_custom_call.1} parent=1 // pred_fallthru
      _
    // Predicated region
    $region14: #{tpu_custom_call.1} parent=1 // pred_check
      _
    $region15: #{tpu_custom_call.1} parent=1 // pred_check_branch
      %41 = sbr.rel (0) target = $region17
    $region16: #{tpu_custom_call.1} parent=1 // pred_region
      %42 = dma.done [#allocation6], 1024
    $region17: #{tpu_custom_call.1} parent=1 // pred_fallthru
      _
    %v43 = vld [vmem:[#allocation2] sm:$0x1]
    %v44 = vld [vmem:[#allocation2 + $0x8] sm:$0x1]
    %v45 = vld [vmem:[#allocation2 + $0x10] sm:$0x1]
    %v46 = vld [vmem:[#allocation2 + $0x18] sm:$0x1]
    %v47 = vld [vmem:[#allocation2 + $0x20] sm:$0x1]
    %v48 = vld [vmem:[#allocation2 + $0x28] sm:$0x1]
    %v49 = vld [vmem:[#allocation2 + $0x30] sm:$0x1]
    %v50 = vld [vmem:[#allocation2 + $0x38] sm:$0x1]
    %v51 = vld [vmem:[#allocation5] sm:$0x1]
    %v52 = vld [vmem:[#allocation5 + $0x8] sm:$0x1]
    %v53 = vld [vmem:[#allocation5 + $0x10] sm:$0x1]
    %v54 = vld [vmem:[#allocation5 + $0x18] sm:$0x1]
    %v55 = vld [vmem:[#allocation5 + $0x20] sm:$0x1]
    %v56 = vld [vmem:[#allocation5 + $0x28] sm:$0x1]
    %v57 = vld [vmem:[#allocation5 + $0x30] sm:$0x1]
    %v58 = vld [vmem:[#allocation5 + $0x38] sm:$0x1]
    %v59 = vmul.f32 %v43, %v43
    %v60 = vmul.f32 %v44, %v44
    %v61 = vmul.f32 %v45, %v45
    %v62 = vmul.f32 %v46, %v46
    %v63 = vmul.f32 %v47, %v47
    %v64 = vmul.f32 %v48, %v48
    %v65 = vmul.f32 %v49, %v49
    %v66 = vmul.f32 %v50, %v50
    %v67 = vadd.f32 %v59, %v51
    %v68 = vadd.f32 %v60, %v52
    %v69 = vadd.f32 %v61, %v53
    %v70 = vadd.f32 %v62, %v54
    %v71 = vadd.f32 %v63, %v55
    %v72 = vadd.f32 %v64, %v56
    %v73 = vadd.f32 %v65, %v57
    %v74 = vadd.f32 %v66, %v58
    %v75 = vld [vmem:[#allocation2 + $0x1] sm:$0x1]
    %v76 = vld [vmem:[#allocation2 + $0x9] sm:$0x1]
    %v77 = vld [vmem:[#allocation2 + $0x11] sm:$0x1]
    %v78 = vld [vmem:[#allocation2 + $0x19] sm:$0x1]
    %v79 = vld [vmem:[#allocation2 + $0x21] sm:$0x1]
    %v80 = vld [vmem:[#allocation2 + $0x29] sm:$0x1]
    %v81 = vld [vmem:[#allocation2 + $0x31] sm:$0x1]
    %v82 = vld [vmem:[#allocation2 + $0x39] sm:$0x1]
    %v83 = vld [vmem:[#allocation5 + $0x1] sm:$0x1]
    %v84 = vld [vmem:[#allocation5 + $0x9] sm:$0x1]
    %v85 = vld [vmem:[#allocation5 + $0x11] sm:$0x1]
    %v86 = vld [vmem:[#allocation5 + $0x19] sm:$0x1]
    %v87 = vld [vmem:[#allocation5 + $0x21] sm:$0x1]
    %v88 = vld [vmem:[#allocation5 + $0x29] sm:$0x1]
    %v89 = vld [vmem:[#allocation5 + $0x31] sm:$0x1]
    %v90 = vld [vmem:[#allocation5 + $0x39] sm:$0x1]
    %v91 = vadd.f32 %v51, %v83
    %v92 = vadd.f32 %v52, %v84
    %v93 = vadd.f32 %v53, %v85
    %v94 = vadd.f32 %v54, %v86
    %v95 = vadd.f32 %v55, %v87
    %v96 = vadd.f32 %v56, %v88
    %v97 = vadd.f32 %v57, %v89
    %v98 = vadd.f32 %v58, %v90
    %v99 = vmax.f32 %v91, 1e-10
    %v100 = vmax.f32 %v92, 1e-10
    %v101 = vmax.f32 %v93, 1e-10
    %v102 = vmax.f32 %v94, 1e-10
    %v103 = vmax.f32 %v95, 1e-10
    %v104 = vmax.f32 %v96, 1e-10
    %v105 = vmax.f32 %v97, 1e-10
    %v106 = vmax.f32 %v98, 1e-10
    %v107 = vrsqrt.pop %v99
    %v108 = vrsqrt.pop %v100
    %v109 = vrsqrt.pop %v101
    %v110 = vrsqrt.pop %v102
    %v111 = vrsqrt.pop %v103
    %v112 = vrsqrt.pop %v104
    %v113 = vrsqrt.pop %v105
    %v114 = vrsqrt.pop %v106
    %v115 = vmul.f32 %v99, %v107
    %v116 = vmul.f32 %v100, %v108
    %v117 = vmul.f32 %v101, %v109
    %v118 = vmul.f32 %v102, %v110
    %v119 = vmul.f32 %v103, %v111
    %v120 = vmul.f32 %v104, %v112
    %v121 = vmul.f32 %v105, %v113
    %v122 = vmul.f32 %v106, %v114
    %v123 = vsub.f32 %v43, %v75
    %v124 = vsub.f32 %v44, %v76
    %v125 = vsub.f32 %v45, %v77
    %v126 = vsub.f32 %v46, %v78
    %v127 = vsub.f32 %v47, %v79
    %v128 = vsub.f32 %v48, %v80
    %v129 = vsub.f32 %v49, %v81
    %v130 = vsub.f32 %v50, %v82
    %v131 = vadd.f32 %v43, %v75
    %v132 = vadd.f32 %v44, %v76
    %v133 = vadd.f32 %v45, %v77
    %v134 = vadd.f32 %v46, %v78
    %v135 = vadd.f32 %v47, %v79
    %v136 = vadd.f32 %v48, %v80
    %v137 = vadd.f32 %v49, %v81
    %v138 = vadd.f32 %v50, %v82
    %v139 = vmul.f32 %v123, %v107
    %v140 = vmul.f32 %v124, %v108
    %v141 = vmul.f32 %v125, %v109
    %v142 = vmul.f32 %v126, %v110
    %v143 = vmul.f32 %v127, %v111
    %v144 = vmul.f32 %v128, %v112
    %v145 = vmul.f32 %v129, %v113
    %v146 = vmul.f32 %v130, %v114
    %v147 = vmul.f32 %v139, %v139
    %v148 = vmul.f32 %v140, %v140
    %v149 = vmul.f32 %v141, %v141
    %v150 = vmul.f32 %v142, %v142
    %v151 = vmul.f32 %v143, %v143
    %v152 = vmul.f32 %v144, %v144
    %v153 = vmul.f32 %v145, %v145
    %v154 = vmul.f32 %v146, %v146
    %v155 = vmul.f32 %v147, -0.5
    %v156 = vmul.f32 %v148, -0.5
    %v157 = vmul.f32 %v149, -0.5
    %v158 = vmul.f32 %v150, -0.5
    %v159 = vmul.f32 %v151, -0.5
    %v160 = vmul.f32 %v152, -0.5
    %v161 = vmul.f32 %v153, -0.5
    %v162 = vmul.f32 %v154, -0.5
    %v163 = vmul.f32 %v155, 1.442695
    %v164 = vpow.pop %v163
    %v165 = vmul.f32 %v156, 1.442695
    %v166 = vpow.pop %v165
    %v167 = vmul.f32 %v157, 1.442695
    %v168 = vpow.pop %v167
    %v169 = vmul.f32 %v158, 1.442695
    %v170 = vpow.pop %v169
    %v171 = vmul.f32 %v159, 1.442695
    %v172 = vpow.pop %v171
    %v173 = vmul.f32 %v160, 1.442695
    %v174 = vpow.pop %v173
    %v175 = vmul.f32 %v161, 1.442695
    %v176 = vpow.pop %v175
    %v177 = vmul.f32 %v162, 1.442695
    %v178 = vpow.pop %v177
    %v179 = vmul.f32 %v164, 0.3989423
    %v180 = vmul.f32 %v166, 0.3989423
    %v181 = vmul.f32 %v168, 0.3989423
    %v182 = vmul.f32 %v170, 0.3989423
    %v183 = vmul.f32 %v172, 0.3989423
    %v184 = vmul.f32 %v174, 0.3989423
    %v185 = vmul.f32 %v176, 0.3989423
    %v186 = vmul.f32 %v178, 0.3989423
    %v187 = vmul.f32 %v139, 0.70710677
    %v188 = vmul.f32 %v140, 0.70710677
    %v189 = vmul.f32 %v141, 0.70710677
    %v190 = vmul.f32 %v142, 0.70710677
    %v191 = vmul.f32 %v143, 0.70710677
    %v192 = vmul.f32 %v144, 0.70710677
    %v193 = vmul.f32 %v145, 0.70710677
    %v194 = vmul.f32 %v146, 0.70710677
    %v195 = verf.f32.pop %v187
    %v196 = verf.f32.pop %v188
    %v197 = verf.f32.pop %v189
    %v198 = verf.f32.pop %v190
    %v199 = verf.f32.pop %v191
    %v200 = verf.f32.pop %v192
    %v201 = verf.f32.pop %v193
    %v202 = verf.f32.pop %v194
    %v203 = vadd.f32 %v195, 1.0
    %v204 = vadd.f32 %v196, 1.0
    %v205 = vadd.f32 %v197, 1.0
    %v206 = vadd.f32 %v198, 1.0
    %v207 = vadd.f32 %v199, 1.0
    %v208 = vadd.f32 %v200, 1.0
    %v209 = vadd.f32 %v201, 1.0
    %v210 = vadd.f32 %v202, 1.0
    %v211 = vmul.f32 %v203, 0.5
    %v212 = vmul.f32 %v204, 0.5
    %v213 = vmul.f32 %v205, 0.5
    %v214 = vmul.f32 %v206, 0.5
    %v215 = vmul.f32 %v207, 0.5
    %v216 = vmul.f32 %v208, 0.5
    %v217 = vmul.f32 %v209, 0.5
    %v218 = vmul.f32 %v210, 0.5
    %v219 = vmul.f32 %v115, %v179
    %v220 = vmul.f32 %v116, %v180
    %v221 = vmul.f32 %v117, %v181
    %v222 = vmul.f32 %v118, %v182
    %v223 = vmul.f32 %v119, %v183
    %v224 = vmul.f32 %v120, %v184
    %v225 = vmul.f32 %v121, %v185
    %v226 = vmul.f32 %v122, %v186
    %v227 = vmul.f32 %v123, %v211
    %v228 = vmul.f32 %v124, %v212
    %v229 = vmul.f32 %v125, %v213
    %v230 = vmul.f32 %v126, %v214
    %v231 = vmul.f32 %v127, %v215
    %v232 = vmul.f32 %v128, %v216
    %v233 = vmul.f32 %v129, %v217
    %v234 = vmul.f32 %v130, %v218
    %v235 = vadd.f32 %v219, %v227
    %v236 = vadd.f32 %v220, %v228
    %v237 = vadd.f32 %v221, %v229
    %v238 = vadd.f32 %v222, %v230
    %v239 = vadd.f32 %v223, %v231
    %v240 = vadd.f32 %v224, %v232
    %v241 = vadd.f32 %v225, %v233
    %v242 = vadd.f32 %v226, %v234
    %v243 = vadd.f32 %v235, %v75
    %v244 = vadd.f32 %v236, %v76
    %v245 = vadd.f32 %v237, %v77
    %v246 = vadd.f32 %v238, %v78
    %v247 = vadd.f32 %v239, %v79
    %v248 = vadd.f32 %v240, %v80
    %v249 = vadd.f32 %v241, %v81
    %v250 = vadd.f32 %v242, %v82
    %v251 = vmul.f32 %v75, %v75
    %v252 = vmul.f32 %v76, %v76
    %v253 = vmul.f32 %v77, %v77
    %v254 = vmul.f32 %v78, %v78
    %v255 = vmul.f32 %v79, %v79
    %v256 = vmul.f32 %v80, %v80
    %v257 = vmul.f32 %v81, %v81
    %v258 = vmul.f32 %v82, %v82
    %v259 = vadd.f32 %v251, %v83
    %v260 = vadd.f32 %v252, %v84
    %v261 = vadd.f32 %v253, %v85
    %v262 = vadd.f32 %v254, %v86
    %v263 = vadd.f32 %v255, %v87
    %v264 = vadd.f32 %v256, %v88
    %v265 = vadd.f32 %v257, %v89
    %v266 = vadd.f32 %v258, %v90
    %v267 = vmul.f32 %v131, %v219
    %v268 = vmul.f32 %v132, %v220
    %v269 = vmul.f32 %v133, %v221
    %v270 = vmul.f32 %v134, %v222
    %v271 = vmul.f32 %v135, %v223
    %v272 = vmul.f32 %v136, %v224
    %v273 = vmul.f32 %v137, %v225
    %v274 = vmul.f32 %v138, %v226
    %v275 = vadd.f32 %v267, %v259
    %v276 = vadd.f32 %v268, %v260
    %v277 = vadd.f32 %v269, %v261
    %v278 = vadd.f32 %v270, %v262
    %v279 = vadd.f32 %v271, %v263
    %v280 = vadd.f32 %v272, %v264
    %v281 = vadd.f32 %v273, %v265
    %v282 = vadd.f32 %v274, %v266
    %v283 = vsub.f32 %v67, %v259
    %v284 = vsub.f32 %v68, %v260
    %v285 = vsub.f32 %v69, %v261
    %v286 = vsub.f32 %v70, %v262
    %v287 = vsub.f32 %v71, %v263
    %v288 = vsub.f32 %v72, %v264
    %v289 = vsub.f32 %v73, %v265
    %v290 = vsub.f32 %v74, %v266
    %v291 = vmul.f32 %v211, %v283
    %v292 = vmul.f32 %v212, %v284
    %v293 = vmul.f32 %v213, %v285
    %v294 = vmul.f32 %v214, %v286
    %v295 = vmul.f32 %v215, %v287
    %v296 = vmul.f32 %v216, %v288
    %v297 = vmul.f32 %v217, %v289
    %v298 = vmul.f32 %v218, %v290
    %v299 = vadd.f32 %v275, %v291
    %v300 = vadd.f32 %v276, %v292
    %v301 = vadd.f32 %v277, %v293
    %v302 = vadd.f32 %v278, %v294
    %v303 = vadd.f32 %v279, %v295
    %v304 = vadd.f32 %v280, %v296
    %v305 = vadd.f32 %v281, %v297
    %v306 = vadd.f32 %v282, %v298
    %v307 = vmul.f32 %v243, %v243
    %v308 = vmul.f32 %v244, %v244
    %v309 = vmul.f32 %v245, %v245
    %v310 = vmul.f32 %v246, %v246
    %v311 = vmul.f32 %v247, %v247
    %v312 = vmul.f32 %v248, %v248
    %v313 = vmul.f32 %v249, %v249
    %v314 = vmul.f32 %v250, %v250
    %v315 = vsub.f32 %v299, %v307
    %v316 = vsub.f32 %v300, %v308
    %v317 = vsub.f32 %v301, %v309
    %v318 = vsub.f32 %v302, %v310
    %v319 = vsub.f32 %v303, %v311
    %v320 = vsub.f32 %v304, %v312
    %v321 = vsub.f32 %v305, %v313
    %v322 = vsub.f32 %v306, %v314
    %v323 = vld [vmem:[#allocation2 + $0x2] sm:$0x1]
    %v324 = vld [vmem:[#allocation2 + $0xa] sm:$0x1]
    %v325 = vld [vmem:[#allocation2 + $0x12] sm:$0x1]
    %v326 = vld [vmem:[#allocation2 + $0x1a] sm:$0x1]
    %v327 = vld [vmem:[#allocation2 + $0x22] sm:$0x1]
    %v328 = vld [vmem:[#allocation2 + $0x2a] sm:$0x1]
    %v329 = vld [vmem:[#allocation2 + $0x32] sm:$0x1]
    %v330 = vld [vmem:[#allocation2 + $0x3a] sm:$0x1]
    %v331 = vld [vmem:[#allocation5 + $0x2] sm:$0x1]
    %v332 = vld [vmem:[#allocation5 + $0xa] sm:$0x1]
    %v333 = vld [vmem:[#allocation5 + $0x12] sm:$0x1]
    %v334 = vld [vmem:[#allocation5 + $0x1a] sm:$0x1]
    %v335 = vld [vmem:[#allocation5 + $0x22] sm:$0x1]
    %v336 = vld [vmem:[#allocation5 + $0x2a] sm:$0x1]
    %v337 = vld [vmem:[#allocation5 + $0x32] sm:$0x1]
    %v338 = vld [vmem:[#allocation5 + $0x3a] sm:$0x1]
    %v339 = vadd.f32 %v315, %v331
    %v340 = vadd.f32 %v316, %v332
    %v341 = vadd.f32 %v317, %v333
    %v342 = vadd.f32 %v318, %v334
    %v343 = vadd.f32 %v319, %v335
    %v344 = vadd.f32 %v320, %v336
    %v345 = vadd.f32 %v321, %v337
    %v346 = vadd.f32 %v322, %v338
    %v347 = vmax.f32 %v339, 1e-10
    %v348 = vmax.f32 %v340, 1e-10
    %v349 = vmax.f32 %v341, 1e-10
    %v350 = vmax.f32 %v342, 1e-10
    %v351 = vmax.f32 %v343, 1e-10
    %v352 = vmax.f32 %v344, 1e-10
    %v353 = vmax.f32 %v345, 1e-10
    %v354 = vmax.f32 %v346, 1e-10
    %v355 = vrsqrt.pop %v347
    %v356 = vrsqrt.pop %v348
    %v357 = vrsqrt.pop %v349
    %v358 = vrsqrt.pop %v350
    %v359 = vrsqrt.pop %v351
    %v360 = vrsqrt.pop %v352
    %v361 = vrsqrt.pop %v353
    %v362 = vrsqrt.pop %v354
    %v363 = vmul.f32 %v347, %v355
    %v364 = vmul.f32 %v348, %v356
    %v365 = vmul.f32 %v349, %v357
    %v366 = vmul.f32 %v350, %v358
    %v367 = vmul.f32 %v351, %v359
    %v368 = vmul.f32 %v352, %v360
    %v369 = vmul.f32 %v353, %v361
    %v370 = vmul.f32 %v354, %v362
    %v371 = vsub.f32 %v243, %v323
    %v372 = vsub.f32 %v244, %v324
    %v373 = vsub.f32 %v245, %v325
    %v374 = vsub.f32 %v246, %v326
    %v375 = vsub.f32 %v247, %v327
    %v376 = vsub.f32 %v248, %v328
    %v377 = vsub.f32 %v249, %v329
    %v378 = vsub.f32 %v250, %v330
    %v379 = vadd.f32 %v243, %v323
    %v380 = vadd.f32 %v244, %v324
    %v381 = vadd.f32 %v245, %v325
    %v382 = vadd.f32 %v246, %v326
    %v383 = vadd.f32 %v247, %v327
    %v384 = vadd.f32 %v248, %v328
    %v385 = vadd.f32 %v249, %v329
    %v386 = vadd.f32 %v250, %v330
    %v387 = vmul.f32 %v371, %v355
    %v388 = vmul.f32 %v372, %v356
    %v389 = vmul.f32 %v373, %v357
    %v390 = vmul.f32 %v374, %v358
    %v391 = vmul.f32 %v375, %v359
    %v392 = vmul.f32 %v376, %v360
    %v393 = vmul.f32 %v377, %v361
    %v394 = vmul.f32 %v378, %v362
    %v395 = vmul.f32 %v387, %v387
    %v396 = vmul.f32 %v388, %v388
    %v397 = vmul.f32 %v389, %v389
    %v398 = vmul.f32 %v390, %v390
    %v399 = vmul.f32 %v391, %v391
    %v400 = vmul.f32 %v392, %v392
    %v401 = vmul.f32 %v393, %v393
    %v402 = vmul.f32 %v394, %v394
    %v403 = vmul.f32 %v395, -0.5
    %v404 = vmul.f32 %v396, -0.5
    %v405 = vmul.f32 %v397, -0.5
    %v406 = vmul.f32 %v398, -0.5
    %v407 = vmul.f32 %v399, -0.5
    %v408 = vmul.f32 %v400, -0.5
    %v409 = vmul.f32 %v401, -0.5
    %v410 = vmul.f32 %v402, -0.5
    %v411 = vmul.f32 %v403, 1.442695
    %v412 = vpow.pop %v411
    %v413 = vmul.f32 %v404, 1.442695
    %v414 = vpow.pop %v413
    %v415 = vmul.f32 %v405, 1.442695
    %v416 = vpow.pop %v415
    %v417 = vmul.f32 %v406, 1.442695
    %v418 = vpow.pop %v417
    %v419 = vmul.f32 %v407, 1.442695
    %v420 = vpow.pop %v419
    %v421 = vmul.f32 %v408, 1.442695
    %v422 = vpow.pop %v421
    %v423 = vmul.f32 %v409, 1.442695
    %v424 = vpow.pop %v423
    %v425 = vmul.f32 %v410, 1.442695
    %v426 = vpow.pop %v425
    %v427 = vmul.f32 %v412, 0.3989423
    %v428 = vmul.f32 %v414, 0.3989423
    %v429 = vmul.f32 %v416, 0.3989423
    %v430 = vmul.f32 %v418, 0.3989423
    %v431 = vmul.f32 %v420, 0.3989423
    %v432 = vmul.f32 %v422, 0.3989423
    %v433 = vmul.f32 %v424, 0.3989423
    %v434 = vmul.f32 %v426, 0.3989423
    %v435 = vmul.f32 %v387, 0.70710677
    %v436 = vmul.f32 %v388, 0.70710677
    %v437 = vmul.f32 %v389, 0.70710677
    %v438 = vmul.f32 %v390, 0.70710677
    %v439 = vmul.f32 %v391, 0.70710677
    %v440 = vmul.f32 %v392, 0.70710677
    %v441 = vmul.f32 %v393, 0.70710677
    %v442 = vmul.f32 %v394, 0.70710677
    %v443 = verf.f32.pop %v435
    %v444 = verf.f32.pop %v436
    %v445 = verf.f32.pop %v437
    %v446 = verf.f32.pop %v438
    %v447 = verf.f32.pop %v439
    %v448 = verf.f32.pop %v440
    %v449 = verf.f32.pop %v441
    %v450 = verf.f32.pop %v442
    %v451 = vadd.f32 %v443, 1.0
    %v452 = vadd.f32 %v444, 1.0
    %v453 = vadd.f32 %v445, 1.0
    %v454 = vadd.f32 %v446, 1.0
    %v455 = vadd.f32 %v447, 1.0
    %v456 = vadd.f32 %v448, 1.0
    %v457 = vadd.f32 %v449, 1.0
    %v458 = vadd.f32 %v450, 1.0
    %v459 = vmul.f32 %v451, 0.5
    %v460 = vmul.f32 %v452, 0.5
    %v461 = vmul.f32 %v453, 0.5
    %v462 = vmul.f32 %v454, 0.5
    %v463 = vmul.f32 %v455, 0.5
    %v464 = vmul.f32 %v456, 0.5
    %v465 = vmul.f32 %v457, 0.5
    %v466 = vmul.f32 %v458, 0.5
    %v467 = vmul.f32 %v363, %v427
    %v468 = vmul.f32 %v364, %v428
    %v469 = vmul.f32 %v365, %v429
    %v470 = vmul.f32 %v366, %v430
    %v471 = vmul.f32 %v367, %v431
    %v472 = vmul.f32 %v368, %v432
    %v473 = vmul.f32 %v369, %v433
    %v474 = vmul.f32 %v370, %v434
    %v475 = vmul.f32 %v371, %v459
    %v476 = vmul.f32 %v372, %v460
    %v477 = vmul.f32 %v373, %v461
    %v478 = vmul.f32 %v374, %v462
    %v479 = vmul.f32 %v375, %v463
    %v480 = vmul.f32 %v376, %v464
    %v481 = vmul.f32 %v377, %v465
    %v482 = vmul.f32 %v378, %v466
    %v483 = vadd.f32 %v467, %v475
    %v484 = vadd.f32 %v468, %v476
    %v485 = vadd.f32 %v469, %v477
    %v486 = vadd.f32 %v470, %v478
    %v487 = vadd.f32 %v471, %v479
    %v488 = vadd.f32 %v472, %v480
    %v489 = vadd.f32 %v473, %v481
    %v490 = vadd.f32 %v474, %v482
    %v491 = vadd.f32 %v483, %v323
    %v492 = vadd.f32 %v484, %v324
    %v493 = vadd.f32 %v485, %v325
    %v494 = vadd.f32 %v486, %v326
    %v495 = vadd.f32 %v487, %v327
    %v496 = vadd.f32 %v488, %v328
    %v497 = vadd.f32 %v489, %v329
    %v498 = vadd.f32 %v490, %v330
    %v499 = vmul.f32 %v323, %v323
    %v500 = vmul.f32 %v324, %v324
    %v501 = vmul.f32 %v325, %v325
    %v502 = vmul.f32 %v326, %v326
    %v503 = vmul.f32 %v327, %v327
    %v504 = vmul.f32 %v328, %v328
    %v505 = vmul.f32 %v329, %v329
    %v506 = vmul.f32 %v330, %v330
    %v507 = vadd.f32 %v499, %v331
    %v508 = vadd.f32 %v500, %v332
    %v509 = vadd.f32 %v501, %v333
    %v510 = vadd.f32 %v502, %v334
    %v511 = vadd.f32 %v503, %v335
    %v512 = vadd.f32 %v504, %v336
    %v513 = vadd.f32 %v505, %v337
    %v514 = vadd.f32 %v506, %v338
    %v515 = vmul.f32 %v379, %v467
    %v516 = vmul.f32 %v380, %v468
    %v517 = vmul.f32 %v381, %v469
    %v518 = vmul.f32 %v382, %v470
    %v519 = vmul.f32 %v383, %v471
    %v520 = vmul.f32 %v384, %v472
    %v521 = vmul.f32 %v385, %v473
    %v522 = vmul.f32 %v386, %v474
    %v523 = vadd.f32 %v515, %v507
    %v524 = vadd.f32 %v516, %v508
    %v525 = vadd.f32 %v517, %v509
    %v526 = vadd.f32 %v518, %v510
    %v527 = vadd.f32 %v519, %v511
    %v528 = vadd.f32 %v520, %v512
    %v529 = vadd.f32 %v521, %v513
    %v530 = vadd.f32 %v522, %v514
    %v531 = vsub.f32 %v299, %v507
    %v532 = vsub.f32 %v300, %v508
    %v533 = vsub.f32 %v301, %v509
    %v534 = vsub.f32 %v302, %v510
    %v535 = vsub.f32 %v303, %v511
    %v536 = vsub.f32 %v304, %v512
    %v537 = vsub.f32 %v305, %v513
    %v538 = vsub.f32 %v306, %v514
    %v539 = vmul.f32 %v459, %v531
    %v540 = vmul.f32 %v460, %v532
    %v541 = vmul.f32 %v461, %v533
    %v542 = vmul.f32 %v462, %v534
    %v543 = vmul.f32 %v463, %v535
    %v544 = vmul.f32 %v464, %v536
    %v545 = vmul.f32 %v465, %v537
    %v546 = vmul.f32 %v466, %v538
    %v547 = vadd.f32 %v523, %v539
    %v548 = vadd.f32 %v524, %v540
    %v549 = vadd.f32 %v525, %v541
    %v550 = vadd.f32 %v526, %v542
    %v551 = vadd.f32 %v527, %v543
    %v552 = vadd.f32 %v528, %v544
    %v553 = vadd.f32 %v529, %v545
    %v554 = vadd.f32 %v530, %v546
    %v555 = vmul.f32 %v491, %v491
    %v556 = vmul.f32 %v492, %v492
    %v557 = vmul.f32 %v493, %v493
    %v558 = vmul.f32 %v494, %v494
    %v559 = vmul.f32 %v495, %v495
    %v560 = vmul.f32 %v496, %v496
    %v561 = vmul.f32 %v497, %v497
    %v562 = vmul.f32 %v498, %v498
    %v563 = vsub.f32 %v547, %v555
    %v564 = vsub.f32 %v548, %v556
    %v565 = vsub.f32 %v549, %v557
    %v566 = vsub.f32 %v550, %v558
    %v567 = vsub.f32 %v551, %v559
    %v568 = vsub.f32 %v552, %v560
    %v569 = vsub.f32 %v553, %v561
    %v570 = vsub.f32 %v554, %v562
    %v571 = vld [vmem:[#allocation2 + $0x3] sm:$0x1]
    %v572 = vld [vmem:[#allocation2 + $0xb] sm:$0x1]
    %v573 = vld [vmem:[#allocation2 + $0x13] sm:$0x1]
    %v574 = vld [vmem:[#allocation2 + $0x1b] sm:$0x1]
    %v575 = vld [vmem:[#allocation2 + $0x23] sm:$0x1]
    %v576 = vld [vmem:[#allocation2 + $0x2b] sm:$0x1]
    %v577 = vld [vmem:[#allocation2 + $0x33] sm:$0x1]
    %v578 = vld [vmem:[#allocation2 + $0x3b] sm:$0x1]
    %v579 = vld [vmem:[#allocation5 + $0x3] sm:$0x1]
    %v580 = vld [vmem:[#allocation5 + $0xb] sm:$0x1]
    %v581 = vld [vmem:[#allocation5 + $0x13] sm:$0x1]
    %v582 = vld [vmem:[#allocation5 + $0x1b] sm:$0x1]
    %v583 = vld [vmem:[#allocation5 + $0x23] sm:$0x1]
    %v584 = vld [vmem:[#allocation5 + $0x2b] sm:$0x1]
    %v585 = vld [vmem:[#allocation5 + $0x33] sm:$0x1]
    %v586 = vld [vmem:[#allocation5 + $0x3b] sm:$0x1]
    %v587 = vadd.f32 %v563, %v579
    %v588 = vadd.f32 %v564, %v580
    %v589 = vadd.f32 %v565, %v581
    %v590 = vadd.f32 %v566, %v582
    %v591 = vadd.f32 %v567, %v583
    %v592 = vadd.f32 %v568, %v584
    %v593 = vadd.f32 %v569, %v585
    %v594 = vadd.f32 %v570, %v586
    %v595 = vmax.f32 %v587, 1e-10
    %v596 = vmax.f32 %v588, 1e-10
    %v597 = vmax.f32 %v589, 1e-10
    %v598 = vmax.f32 %v590, 1e-10
    %v599 = vmax.f32 %v591, 1e-10
    %v600 = vmax.f32 %v592, 1e-10
    %v601 = vmax.f32 %v593, 1e-10
    %v602 = vmax.f32 %v594, 1e-10
    %v603 = vrsqrt.pop %v595
    %v604 = vrsqrt.pop %v596
    %v605 = vrsqrt.pop %v597
    %v606 = vrsqrt.pop %v598
    %v607 = vrsqrt.pop %v599
    %v608 = vrsqrt.pop %v600
    %v609 = vrsqrt.pop %v601
    %v610 = vrsqrt.pop %v602
    %v611 = vmul.f32 %v595, %v603
    %v612 = vmul.f32 %v596, %v604
    %v613 = vmul.f32 %v597, %v605
    %v614 = vmul.f32 %v598, %v606
    %v615 = vmul.f32 %v599, %v607
    %v616 = vmul.f32 %v600, %v608
    %v617 = vmul.f32 %v601, %v609
    %v618 = vmul.f32 %v602, %v610
    %v619 = vsub.f32 %v491, %v571
    %v620 = vsub.f32 %v492, %v572
    %v621 = vsub.f32 %v493, %v573
    %v622 = vsub.f32 %v494, %v574
    %v623 = vsub.f32 %v495, %v575
    %v624 = vsub.f32 %v496, %v576
    %v625 = vsub.f32 %v497, %v577
    %v626 = vsub.f32 %v498, %v578
    %v627 = vadd.f32 %v491, %v571
    %v628 = vadd.f32 %v492, %v572
    %v629 = vadd.f32 %v493, %v573
    %v630 = vadd.f32 %v494, %v574
    %v631 = vadd.f32 %v495, %v575
    %v632 = vadd.f32 %v496, %v576
    %v633 = vadd.f32 %v497, %v577
    %v634 = vadd.f32 %v498, %v578
    %v635 = vmul.f32 %v619, %v603
    %v636 = vmul.f32 %v620, %v604
    %v637 = vmul.f32 %v621, %v605
    %v638 = vmul.f32 %v622, %v606
    %v639 = vmul.f32 %v623, %v607
    %v640 = vmul.f32 %v624, %v608
    %v641 = vmul.f32 %v625, %v609
    %v642 = vmul.f32 %v626, %v610
    %v643 = vmul.f32 %v635, %v635
    %v644 = vmul.f32 %v636, %v636
    %v645 = vmul.f32 %v637, %v637
    %v646 = vmul.f32 %v638, %v638
    %v647 = vmul.f32 %v639, %v639
    %v648 = vmul.f32 %v640, %v640
    %v649 = vmul.f32 %v641, %v641
    %v650 = vmul.f32 %v642, %v642
    %v651 = vmul.f32 %v643, -0.5
    %v652 = vmul.f32 %v644, -0.5
    %v653 = vmul.f32 %v645, -0.5
    %v654 = vmul.f32 %v646, -0.5
    %v655 = vmul.f32 %v647, -0.5
    %v656 = vmul.f32 %v648, -0.5
    %v657 = vmul.f32 %v649, -0.5
    %v658 = vmul.f32 %v650, -0.5
    %v659 = vmul.f32 %v651, 1.442695
    %v660 = vpow.pop %v659
    %v661 = vmul.f32 %v652, 1.442695
    %v662 = vpow.pop %v661
    %v663 = vmul.f32 %v653, 1.442695
    %v664 = vpow.pop %v663
    %v665 = vmul.f32 %v654, 1.442695
    %v666 = vpow.pop %v665
    %v667 = vmul.f32 %v655, 1.442695
    %v668 = vpow.pop %v667
    %v669 = vmul.f32 %v656, 1.442695
    %v670 = vpow.pop %v669
    %v671 = vmul.f32 %v657, 1.442695
    %v672 = vpow.pop %v671
    %v673 = vmul.f32 %v658, 1.442695
    %v674 = vpow.pop %v673
    %v675 = vmul.f32 %v660, 0.3989423
    %v676 = vmul.f32 %v662, 0.3989423
    %v677 = vmul.f32 %v664, 0.3989423
    %v678 = vmul.f32 %v666, 0.3989423
    %v679 = vmul.f32 %v668, 0.3989423
    %v680 = vmul.f32 %v670, 0.3989423
    %v681 = vmul.f32 %v672, 0.3989423
    %v682 = vmul.f32 %v674, 0.3989423
    %v683 = vmul.f32 %v635, 0.70710677
    %v684 = vmul.f32 %v636, 0.70710677
    %v685 = vmul.f32 %v637, 0.70710677
    %v686 = vmul.f32 %v638, 0.70710677
    %v687 = vmul.f32 %v639, 0.70710677
    %v688 = vmul.f32 %v640, 0.70710677
    %v689 = vmul.f32 %v641, 0.70710677
    %v690 = vmul.f32 %v642, 0.70710677
    %v691 = verf.f32.pop %v683
    %v692 = verf.f32.pop %v684
    %v693 = verf.f32.pop %v685
    %v694 = verf.f32.pop %v686
    %v695 = verf.f32.pop %v687
    %v696 = verf.f32.pop %v688
    %v697 = verf.f32.pop %v689
    %v698 = verf.f32.pop %v690
    %v699 = vadd.f32 %v691, 1.0
    %v700 = vadd.f32 %v692, 1.0
    %v701 = vadd.f32 %v693, 1.0
    %v702 = vadd.f32 %v694, 1.0
    %v703 = vadd.f32 %v695, 1.0
    %v704 = vadd.f32 %v696, 1.0
    %v705 = vadd.f32 %v697, 1.0
    %v706 = vadd.f32 %v698, 1.0
    %v707 = vmul.f32 %v699, 0.5
    %v708 = vmul.f32 %v700, 0.5
    %v709 = vmul.f32 %v701, 0.5
    %v710 = vmul.f32 %v702, 0.5
    %v711 = vmul.f32 %v703, 0.5
    %v712 = vmul.f32 %v704, 0.5
    %v713 = vmul.f32 %v705, 0.5
    %v714 = vmul.f32 %v706, 0.5
    %v715 = vmul.f32 %v611, %v675
    %v716 = vmul.f32 %v612, %v676
    %v717 = vmul.f32 %v613, %v677
    %v718 = vmul.f32 %v614, %v678
    %v719 = vmul.f32 %v615, %v679
    %v720 = vmul.f32 %v616, %v680
    %v721 = vmul.f32 %v617, %v681
    %v722 = vmul.f32 %v618, %v682
    %v723 = vmul.f32 %v619, %v707
    %v724 = vmul.f32 %v620, %v708
    %v725 = vmul.f32 %v621, %v709
    %v726 = vmul.f32 %v622, %v710
    %v727 = vmul.f32 %v623, %v711
    %v728 = vmul.f32 %v624, %v712
    %v729 = vmul.f32 %v625, %v713
    %v730 = vmul.f32 %v626, %v714
    %v731 = vadd.f32 %v715, %v723
    %v732 = vadd.f32 %v716, %v724
    %v733 = vadd.f32 %v717, %v725
    %v734 = vadd.f32 %v718, %v726
    %v735 = vadd.f32 %v719, %v727
    %v736 = vadd.f32 %v720, %v728
    %v737 = vadd.f32 %v721, %v729
    %v738 = vadd.f32 %v722, %v730
    %v739 = vadd.f32 %v731, %v571
    %v740 = vadd.f32 %v732, %v572
    %v741 = vadd.f32 %v733, %v573
    %v742 = vadd.f32 %v734, %v574
    %v743 = vadd.f32 %v735, %v575
    %v744 = vadd.f32 %v736, %v576
    %v745 = vadd.f32 %v737, %v577
    %v746 = vadd.f32 %v738, %v578
    %v747 = vmul.f32 %v571, %v571
    %v748 = vmul.f32 %v572, %v572
    %v749 = vmul.f32 %v573, %v573
    %v750 = vmul.f32 %v574, %v574
    %v751 = vmul.f32 %v575, %v575
    %v752 = vmul.f32 %v576, %v576
    %v753 = vmul.f32 %v577, %v577
    %v754 = vmul.f32 %v578, %v578
    %v755 = vadd.f32 %v747, %v579
    %v756 = vadd.f32 %v748, %v580
    %v757 = vadd.f32 %v749, %v581
    %v758 = vadd.f32 %v750, %v582
    %v759 = vadd.f32 %v751, %v583
    %v760 = vadd.f32 %v752, %v584
    %v761 = vadd.f32 %v753, %v585
    %v762 = vadd.f32 %v754, %v586
    %v763 = vmul.f32 %v627, %v715
    %v764 = vmul.f32 %v628, %v716
    %v765 = vmul.f32 %v629, %v717
    %v766 = vmul.f32 %v630, %v718
    %v767 = vmul.f32 %v631, %v719
    %v768 = vmul.f32 %v632, %v720
    %v769 = vmul.f32 %v633, %v721
    %v770 = vmul.f32 %v634, %v722
    %v771 = vadd.f32 %v763, %v755
    %v772 = vadd.f32 %v764, %v756
    %v773 = vadd.f32 %v765, %v757
    %v774 = vadd.f32 %v766, %v758
    %v775 = vadd.f32 %v767, %v759
    %v776 = vadd.f32 %v768, %v760
    %v777 = vadd.f32 %v769, %v761
    %v778 = vadd.f32 %v770, %v762
    %v779 = vsub.f32 %v547, %v755
    %v780 = vsub.f32 %v548, %v756
    %v781 = vsub.f32 %v549, %v757
    %v782 = vsub.f32 %v550, %v758
    %v783 = vsub.f32 %v551, %v759
    %v784 = vsub.f32 %v552, %v760
    %v785 = vsub.f32 %v553, %v761
    %v786 = vsub.f32 %v554, %v762
    %v787 = vmul.f32 %v707, %v779
    %v788 = vmul.f32 %v708, %v780
    %v789 = vmul.f32 %v709, %v781
    %v790 = vmul.f32 %v710, %v782
    %v791 = vmul.f32 %v711, %v783
    %v792 = vmul.f32 %v712, %v784
    %v793 = vmul.f32 %v713, %v785
    %v794 = vmul.f32 %v714, %v786
    %v795 = vadd.f32 %v771, %v787
    %v796 = vadd.f32 %v772, %v788
    %v797 = vadd.f32 %v773, %v789
    %v798 = vadd.f32 %v774, %v790
    %v799 = vadd.f32 %v775, %v791
    %v800 = vadd.f32 %v776, %v792
    %v801 = vadd.f32 %v777, %v793
    %v802 = vadd.f32 %v778, %v794
    %v803 = vmul.f32 %v739, %v739
    %v804 = vmul.f32 %v740, %v740
    %v805 = vmul.f32 %v741, %v741
    %v806 = vmul.f32 %v742, %v742
    %v807 = vmul.f32 %v743, %v743
    %v808 = vmul.f32 %v744, %v744
    %v809 = vmul.f32 %v745, %v745
    %v810 = vmul.f32 %v746, %v746
    %v811 = vsub.f32 %v795, %v803
    %v812 = vsub.f32 %v796, %v804
    %v813 = vsub.f32 %v797, %v805
    %v814 = vsub.f32 %v798, %v806
    %v815 = vsub.f32 %v799, %v807
    %v816 = vsub.f32 %v800, %v808
    %v817 = vsub.f32 %v801, %v809
    %v818 = vsub.f32 %v802, %v810
    %v819 = vld [vmem:[#allocation2 + $0x4] sm:$0x1]
    %v820 = vld [vmem:[#allocation2 + $0xc] sm:$0x1]
    %v821 = vld [vmem:[#allocation2 + $0x14] sm:$0x1]
    %v822 = vld [vmem:[#allocation2 + $0x1c] sm:$0x1]
    %v823 = vld [vmem:[#allocation2 + $0x24] sm:$0x1]
    %v824 = vld [vmem:[#allocation2 + $0x2c] sm:$0x1]
    %v825 = vld [vmem:[#allocation2 + $0x34] sm:$0x1]
    %v826 = vld [vmem:[#allocation2 + $0x3c] sm:$0x1]
    %v827 = vld [vmem:[#allocation5 + $0x4] sm:$0x1]
    %v828 = vld [vmem:[#allocation5 + $0xc] sm:$0x1]
    %v829 = vld [vmem:[#allocation5 + $0x14] sm:$0x1]
    %v830 = vld [vmem:[#allocation5 + $0x1c] sm:$0x1]
    %v831 = vld [vmem:[#allocation5 + $0x24] sm:$0x1]
    %v832 = vld [vmem:[#allocation5 + $0x2c] sm:$0x1]
    %v833 = vld [vmem:[#allocation5 + $0x34] sm:$0x1]
    %v834 = vld [vmem:[#allocation5 + $0x3c] sm:$0x1]
    %v835 = vadd.f32 %v811, %v827
    %v836 = vadd.f32 %v812, %v828
    %v837 = vadd.f32 %v813, %v829
    %v838 = vadd.f32 %v814, %v830
    %v839 = vadd.f32 %v815, %v831
    %v840 = vadd.f32 %v816, %v832
    %v841 = vadd.f32 %v817, %v833
    %v842 = vadd.f32 %v818, %v834
    %v843 = vmax.f32 %v835, 1e-10
    %v844 = vmax.f32 %v836, 1e-10
    %v845 = vmax.f32 %v837, 1e-10
    %v846 = vmax.f32 %v838, 1e-10
    %v847 = vmax.f32 %v839, 1e-10
    %v848 = vmax.f32 %v840, 1e-10
    %v849 = vmax.f32 %v841, 1e-10
    %v850 = vmax.f32 %v842, 1e-10
    %v851 = vrsqrt.pop %v843
    %v852 = vrsqrt.pop %v844
    %v853 = vrsqrt.pop %v845
    %v854 = vrsqrt.pop %v846
    %v855 = vrsqrt.pop %v847
    %v856 = vrsqrt.pop %v848
    %v857 = vrsqrt.pop %v849
    %v858 = vrsqrt.pop %v850
    %v859 = vmul.f32 %v843, %v851
    %v860 = vmul.f32 %v844, %v852
    %v861 = vmul.f32 %v845, %v853
    %v862 = vmul.f32 %v846, %v854
    %v863 = vmul.f32 %v847, %v855
    %v864 = vmul.f32 %v848, %v856
    %v865 = vmul.f32 %v849, %v857
    %v866 = vmul.f32 %v850, %v858
    %v867 = vsub.f32 %v739, %v819
    %v868 = vsub.f32 %v740, %v820
    %v869 = vsub.f32 %v741, %v821
    %v870 = vsub.f32 %v742, %v822
    %v871 = vsub.f32 %v743, %v823
    %v872 = vsub.f32 %v744, %v824
    %v873 = vsub.f32 %v745, %v825
    %v874 = vsub.f32 %v746, %v826
    %v875 = vadd.f32 %v739, %v819
    %v876 = vadd.f32 %v740, %v820
    %v877 = vadd.f32 %v741, %v821
    %v878 = vadd.f32 %v742, %v822
    %v879 = vadd.f32 %v743, %v823
    %v880 = vadd.f32 %v744, %v824
    %v881 = vadd.f32 %v745, %v825
    %v882 = vadd.f32 %v746, %v826
    %v883 = vmul.f32 %v867, %v851
    %v884 = vmul.f32 %v868, %v852
    %v885 = vmul.f32 %v869, %v853
    %v886 = vmul.f32 %v870, %v854
    %v887 = vmul.f32 %v871, %v855
    %v888 = vmul.f32 %v872, %v856
    %v889 = vmul.f32 %v873, %v857
    %v890 = vmul.f32 %v874, %v858
    %v891 = vmul.f32 %v883, %v883
    %v892 = vmul.f32 %v884, %v884
    %v893 = vmul.f32 %v885, %v885
    %v894 = vmul.f32 %v886, %v886
    %v895 = vmul.f32 %v887, %v887
    %v896 = vmul.f32 %v888, %v888
    %v897 = vmul.f32 %v889, %v889
    %v898 = vmul.f32 %v890, %v890
    %v899 = vmul.f32 %v891, -0.5
    %v900 = vmul.f32 %v892, -0.5
    %v901 = vmul.f32 %v893, -0.5
    %v902 = vmul.f32 %v894, -0.5
    %v903 = vmul.f32 %v895, -0.5
    %v904 = vmul.f32 %v896, -0.5
    %v905 = vmul.f32 %v897, -0.5
    %v906 = vmul.f32 %v898, -0.5
    %v907 = vmul.f32 %v899, 1.442695
    %v908 = vpow.pop %v907
    %v909 = vmul.f32 %v900, 1.442695
    %v910 = vpow.pop %v909
    %v911 = vmul.f32 %v901, 1.442695
    %v912 = vpow.pop %v911
    %v913 = vmul.f32 %v902, 1.442695
    %v914 = vpow.pop %v913
    %v915 = vmul.f32 %v903, 1.442695
    %v916 = vpow.pop %v915
    %v917 = vmul.f32 %v904, 1.442695
    %v918 = vpow.pop %v917
    %v919 = vmul.f32 %v905, 1.442695
    %v920 = vpow.pop %v919
    %v921 = vmul.f32 %v906, 1.442695
    %v922 = vpow.pop %v921
    %v923 = vmul.f32 %v908, 0.3989423
    %v924 = vmul.f32 %v910, 0.3989423
    %v925 = vmul.f32 %v912, 0.3989423
    %v926 = vmul.f32 %v914, 0.3989423
    %v927 = vmul.f32 %v916, 0.3989423
    %v928 = vmul.f32 %v918, 0.3989423
    %v929 = vmul.f32 %v920, 0.3989423
    %v930 = vmul.f32 %v922, 0.3989423
    %v931 = vmul.f32 %v883, 0.70710677
    %v932 = vmul.f32 %v884, 0.70710677
    %v933 = vmul.f32 %v885, 0.70710677
    %v934 = vmul.f32 %v886, 0.70710677
    %v935 = vmul.f32 %v887, 0.70710677
    %v936 = vmul.f32 %v888, 0.70710677
    %v937 = vmul.f32 %v889, 0.70710677
    %v938 = vmul.f32 %v890, 0.70710677
    %v939 = verf.f32.pop %v931
    %v940 = verf.f32.pop %v932
    %v941 = verf.f32.pop %v933
    %v942 = verf.f32.pop %v934
    %v943 = verf.f32.pop %v935
    %v944 = verf.f32.pop %v936
    %v945 = verf.f32.pop %v937
    %v946 = verf.f32.pop %v938
    %v947 = vadd.f32 %v939, 1.0
    %v948 = vadd.f32 %v940, 1.0
    %v949 = vadd.f32 %v941, 1.0
    %v950 = vadd.f32 %v942, 1.0
    %v951 = vadd.f32 %v943, 1.0
    %v952 = vadd.f32 %v944, 1.0
    %v953 = vadd.f32 %v945, 1.0
    %v954 = vadd.f32 %v946, 1.0
    %v955 = vmul.f32 %v947, 0.5
    %v956 = vmul.f32 %v948, 0.5
    %v957 = vmul.f32 %v949, 0.5
    %v958 = vmul.f32 %v950, 0.5
    %v959 = vmul.f32 %v951, 0.5
    %v960 = vmul.f32 %v952, 0.5
    %v961 = vmul.f32 %v953, 0.5
    %v962 = vmul.f32 %v954, 0.5
    %v963 = vmul.f32 %v859, %v923
    %v964 = vmul.f32 %v860, %v924
    %v965 = vmul.f32 %v861, %v925
    %v966 = vmul.f32 %v862, %v926
    %v967 = vmul.f32 %v863, %v927
    %v968 = vmul.f32 %v864, %v928
    %v969 = vmul.f32 %v865, %v929
    %v970 = vmul.f32 %v866, %v930
    %v971 = vmul.f32 %v867, %v955
    %v972 = vmul.f32 %v868, %v956
    %v973 = vmul.f32 %v869, %v957
    %v974 = vmul.f32 %v870, %v958
    %v975 = vmul.f32 %v871, %v959
    %v976 = vmul.f32 %v872, %v960
    %v977 = vmul.f32 %v873, %v961
    %v978 = vmul.f32 %v874, %v962
    %v979 = vadd.f32 %v963, %v971
    %v980 = vadd.f32 %v964, %v972
    %v981 = vadd.f32 %v965, %v973
    %v982 = vadd.f32 %v966, %v974
    %v983 = vadd.f32 %v967, %v975
    %v984 = vadd.f32 %v968, %v976
    %v985 = vadd.f32 %v969, %v977
    %v986 = vadd.f32 %v970, %v978
    %v987 = vadd.f32 %v979, %v819
    %v988 = vadd.f32 %v980, %v820
    %v989 = vadd.f32 %v981, %v821
    %v990 = vadd.f32 %v982, %v822
    %v991 = vadd.f32 %v983, %v823
    %v992 = vadd.f32 %v984, %v824
    %v993 = vadd.f32 %v985, %v825
    %v994 = vadd.f32 %v986, %v826
    %v995 = vmul.f32 %v819, %v819
    %v996 = vmul.f32 %v820, %v820
    %v997 = vmul.f32 %v821, %v821
    %v998 = vmul.f32 %v822, %v822
    %v999 = vmul.f32 %v823, %v823
    %v1000 = vmul.f32 %v824, %v824
    %v1001 = vmul.f32 %v825, %v825
    %v1002 = vmul.f32 %v826, %v826
    %v1003 = vadd.f32 %v995, %v827
    %v1004 = vadd.f32 %v996, %v828
    %v1005 = vadd.f32 %v997, %v829
    %v1006 = vadd.f32 %v998, %v830
    %v1007 = vadd.f32 %v999, %v831
    %v1008 = vadd.f32 %v1000, %v832
    %v1009 = vadd.f32 %v1001, %v833
    %v1010 = vadd.f32 %v1002, %v834
    %v1011 = vmul.f32 %v875, %v963
    %v1012 = vmul.f32 %v876, %v964
    %v1013 = vmul.f32 %v877, %v965
    %v1014 = vmul.f32 %v878, %v966
    %v1015 = vmul.f32 %v879, %v967
    %v1016 = vmul.f32 %v880, %v968
    %v1017 = vmul.f32 %v881, %v969
    %v1018 = vmul.f32 %v882, %v970
    %v1019 = vadd.f32 %v1011, %v1003
    %v1020 = vadd.f32 %v1012, %v1004
    %v1021 = vadd.f32 %v1013, %v1005
    %v1022 = vadd.f32 %v1014, %v1006
    %v1023 = vadd.f32 %v1015, %v1007
    %v1024 = vadd.f32 %v1016, %v1008
    %v1025 = vadd.f32 %v1017, %v1009
    %v1026 = vadd.f32 %v1018, %v1010
    %v1027 = vsub.f32 %v795, %v1003
    %v1028 = vsub.f32 %v796, %v1004
    %v1029 = vsub.f32 %v797, %v1005
    %v1030 = vsub.f32 %v798, %v1006
    %v1031 = vsub.f32 %v799, %v1007
    %v1032 = vsub.f32 %v800, %v1008
    %v1033 = vsub.f32 %v801, %v1009
    %v1034 = vsub.f32 %v802, %v1010
    %v1035 = vmul.f32 %v955, %v1027
    %v1036 = vmul.f32 %v956, %v1028
    %v1037 = vmul.f32 %v957, %v1029
    %v1038 = vmul.f32 %v958, %v1030
    %v1039 = vmul.f32 %v959, %v1031
    %v1040 = vmul.f32 %v960, %v1032
    %v1041 = vmul.f32 %v961, %v1033
    %v1042 = vmul.f32 %v962, %v1034
    %v1043 = vadd.f32 %v1019, %v1035
    %v1044 = vadd.f32 %v1020, %v1036
    %v1045 = vadd.f32 %v1021, %v1037
    %v1046 = vadd.f32 %v1022, %v1038
    %v1047 = vadd.f32 %v1023, %v1039
    %v1048 = vadd.f32 %v1024, %v1040
    %v1049 = vadd.f32 %v1025, %v1041
    %v1050 = vadd.f32 %v1026, %v1042
    %v1051 = vmul.f32 %v987, %v987
    %v1052 = vmul.f32 %v988, %v988
    %v1053 = vmul.f32 %v989, %v989
    %v1054 = vmul.f32 %v990, %v990
    %v1055 = vmul.f32 %v991, %v991
    %v1056 = vmul.f32 %v992, %v992
    %v1057 = vmul.f32 %v993, %v993
    %v1058 = vmul.f32 %v994, %v994
    %v1059 = vsub.f32 %v1043, %v1051
    %v1060 = vsub.f32 %v1044, %v1052
    %v1061 = vsub.f32 %v1045, %v1053
    %v1062 = vsub.f32 %v1046, %v1054
    %v1063 = vsub.f32 %v1047, %v1055
    %v1064 = vsub.f32 %v1048, %v1056
    %v1065 = vsub.f32 %v1049, %v1057
    %v1066 = vsub.f32 %v1050, %v1058
    %v1067 = vld [vmem:[#allocation2 + $0x5] sm:$0x1]
    %v1068 = vld [vmem:[#allocation2 + $0xd] sm:$0x1]
    %v1069 = vld [vmem:[#allocation2 + $0x15] sm:$0x1]
    %v1070 = vld [vmem:[#allocation2 + $0x1d] sm:$0x1]
    %v1071 = vld [vmem:[#allocation2 + $0x25] sm:$0x1]
    %v1072 = vld [vmem:[#allocation2 + $0x2d] sm:$0x1]
    %v1073 = vld [vmem:[#allocation2 + $0x35] sm:$0x1]
    %v1074 = vld [vmem:[#allocation2 + $0x3d] sm:$0x1]
    %v1075 = vld [vmem:[#allocation5 + $0x5] sm:$0x1]
    %v1076 = vld [vmem:[#allocation5 + $0xd] sm:$0x1]
    %v1077 = vld [vmem:[#allocation5 + $0x15] sm:$0x1]
    %v1078 = vld [vmem:[#allocation5 + $0x1d] sm:$0x1]
    %v1079 = vld [vmem:[#allocation5 + $0x25] sm:$0x1]
    %v1080 = vld [vmem:[#allocation5 + $0x2d] sm:$0x1]
    %v1081 = vld [vmem:[#allocation5 + $0x35] sm:$0x1]
    %v1082 = vld [vmem:[#allocation5 + $0x3d] sm:$0x1]
    %v1083 = vadd.f32 %v1059, %v1075
    %v1084 = vadd.f32 %v1060, %v1076
    %v1085 = vadd.f32 %v1061, %v1077
    %v1086 = vadd.f32 %v1062, %v1078
    %v1087 = vadd.f32 %v1063, %v1079
    %v1088 = vadd.f32 %v1064, %v1080
    %v1089 = vadd.f32 %v1065, %v1081
    %v1090 = vadd.f32 %v1066, %v1082
    %v1091 = vmax.f32 %v1083, 1e-10
    %v1092 = vmax.f32 %v1084, 1e-10
    %v1093 = vmax.f32 %v1085, 1e-10
    %v1094 = vmax.f32 %v1086, 1e-10
    %v1095 = vmax.f32 %v1087, 1e-10
    %v1096 = vmax.f32 %v1088, 1e-10
    %v1097 = vmax.f32 %v1089, 1e-10
    %v1098 = vmax.f32 %v1090, 1e-10
    %v1099 = vrsqrt.pop %v1091
    %v1100 = vrsqrt.pop %v1092
    %v1101 = vrsqrt.pop %v1093
    %v1102 = vrsqrt.pop %v1094
    %v1103 = vrsqrt.pop %v1095
    %v1104 = vrsqrt.pop %v1096
    %v1105 = vrsqrt.pop %v1097
    %v1106 = vrsqrt.pop %v1098
    %v1107 = vmul.f32 %v1091, %v1099
    %v1108 = vmul.f32 %v1092, %v1100
    %v1109 = vmul.f32 %v1093, %v1101
    %v1110 = vmul.f32 %v1094, %v1102
    %v1111 = vmul.f32 %v1095, %v1103
    %v1112 = vmul.f32 %v1096, %v1104
    %v1113 = vmul.f32 %v1097, %v1105
    %v1114 = vmul.f32 %v1098, %v1106
    %v1115 = vsub.f32 %v987, %v1067
    %v1116 = vsub.f32 %v988, %v1068
    %v1117 = vsub.f32 %v989, %v1069
    %v1118 = vsub.f32 %v990, %v1070
    %v1119 = vsub.f32 %v991, %v1071
    %v1120 = vsub.f32 %v992, %v1072
    %v1121 = vsub.f32 %v993, %v1073
    %v1122 = vsub.f32 %v994, %v1074
    %v1123 = vadd.f32 %v987, %v1067
    %v1124 = vadd.f32 %v988, %v1068
    %v1125 = vadd.f32 %v989, %v1069
    %v1126 = vadd.f32 %v990, %v1070
    %v1127 = vadd.f32 %v991, %v1071
    %v1128 = vadd.f32 %v992, %v1072
    %v1129 = vadd.f32 %v993, %v1073
    %v1130 = vadd.f32 %v994, %v1074
    %v1131 = vmul.f32 %v1115, %v1099
    %v1132 = vmul.f32 %v1116, %v1100
    %v1133 = vmul.f32 %v1117, %v1101
    %v1134 = vmul.f32 %v1118, %v1102
    %v1135 = vmul.f32 %v1119, %v1103
    %v1136 = vmul.f32 %v1120, %v1104
    %v1137 = vmul.f32 %v1121, %v1105
    %v1138 = vmul.f32 %v1122, %v1106
    %v1139 = vmul.f32 %v1131, %v1131
    %v1140 = vmul.f32 %v1132, %v1132
    %v1141 = vmul.f32 %v1133, %v1133
    %v1142 = vmul.f32 %v1134, %v1134
    %v1143 = vmul.f32 %v1135, %v1135
    %v1144 = vmul.f32 %v1136, %v1136
    %v1145 = vmul.f32 %v1137, %v1137
    %v1146 = vmul.f32 %v1138, %v1138
    %v1147 = vmul.f32 %v1139, -0.5
    %v1148 = vmul.f32 %v1140, -0.5
    %v1149 = vmul.f32 %v1141, -0.5
    %v1150 = vmul.f32 %v1142, -0.5
    %v1151 = vmul.f32 %v1143, -0.5
    %v1152 = vmul.f32 %v1144, -0.5
    %v1153 = vmul.f32 %v1145, -0.5
    %v1154 = vmul.f32 %v1146, -0.5
    %v1155 = vmul.f32 %v1147, 1.442695
    %v1156 = vpow.pop %v1155
    %v1157 = vmul.f32 %v1148, 1.442695
    %v1158 = vpow.pop %v1157
    %v1159 = vmul.f32 %v1149, 1.442695
    %v1160 = vpow.pop %v1159
    %v1161 = vmul.f32 %v1150, 1.442695
    %v1162 = vpow.pop %v1161
    %v1163 = vmul.f32 %v1151, 1.442695
    %v1164 = vpow.pop %v1163
    %v1165 = vmul.f32 %v1152, 1.442695
    %v1166 = vpow.pop %v1165
    %v1167 = vmul.f32 %v1153, 1.442695
    %v1168 = vpow.pop %v1167
    %v1169 = vmul.f32 %v1154, 1.442695
    %v1170 = vpow.pop %v1169
    %v1171 = vmul.f32 %v1156, 0.3989423
    %v1172 = vmul.f32 %v1158, 0.3989423
    %v1173 = vmul.f32 %v1160, 0.3989423
    %v1174 = vmul.f32 %v1162, 0.3989423
    %v1175 = vmul.f32 %v1164, 0.3989423
    %v1176 = vmul.f32 %v1166, 0.3989423
    %v1177 = vmul.f32 %v1168, 0.3989423
    %v1178 = vmul.f32 %v1170, 0.3989423
    %v1179 = vmul.f32 %v1131, 0.70710677
    %v1180 = vmul.f32 %v1132, 0.70710677
    %v1181 = vmul.f32 %v1133, 0.70710677
    %v1182 = vmul.f32 %v1134, 0.70710677
    %v1183 = vmul.f32 %v1135, 0.70710677
    %v1184 = vmul.f32 %v1136, 0.70710677
    %v1185 = vmul.f32 %v1137, 0.70710677
    %v1186 = vmul.f32 %v1138, 0.70710677
    %v1187 = verf.f32.pop %v1179
    %v1188 = verf.f32.pop %v1180
    %v1189 = verf.f32.pop %v1181
    %v1190 = verf.f32.pop %v1182
    %v1191 = verf.f32.pop %v1183
    %v1192 = verf.f32.pop %v1184
    %v1193 = verf.f32.pop %v1185
    %v1194 = verf.f32.pop %v1186
    %v1195 = vadd.f32 %v1187, 1.0
    %v1196 = vadd.f32 %v1188, 1.0
    %v1197 = vadd.f32 %v1189, 1.0
    %v1198 = vadd.f32 %v1190, 1.0
    %v1199 = vadd.f32 %v1191, 1.0
    %v1200 = vadd.f32 %v1192, 1.0
    %v1201 = vadd.f32 %v1193, 1.0
    %v1202 = vadd.f32 %v1194, 1.0
    %v1203 = vmul.f32 %v1195, 0.5
    %v1204 = vmul.f32 %v1196, 0.5
    %v1205 = vmul.f32 %v1197, 0.5
    %v1206 = vmul.f32 %v1198, 0.5
    %v1207 = vmul.f32 %v1199, 0.5
    %v1208 = vmul.f32 %v1200, 0.5
    %v1209 = vmul.f32 %v1201, 0.5
    %v1210 = vmul.f32 %v1202, 0.5
    %v1211 = vmul.f32 %v1107, %v1171
    %v1212 = vmul.f32 %v1108, %v1172
    %v1213 = vmul.f32 %v1109, %v1173
    %v1214 = vmul.f32 %v1110, %v1174
    %v1215 = vmul.f32 %v1111, %v1175
    %v1216 = vmul.f32 %v1112, %v1176
    %v1217 = vmul.f32 %v1113, %v1177
    %v1218 = vmul.f32 %v1114, %v1178
    %v1219 = vmul.f32 %v1115, %v1203
    %v1220 = vmul.f32 %v1116, %v1204
    %v1221 = vmul.f32 %v1117, %v1205
    %v1222 = vmul.f32 %v1118, %v1206
    %v1223 = vmul.f32 %v1119, %v1207
    %v1224 = vmul.f32 %v1120, %v1208
    %v1225 = vmul.f32 %v1121, %v1209
    %v1226 = vmul.f32 %v1122, %v1210
    %v1227 = vadd.f32 %v1211, %v1219
    %v1228 = vadd.f32 %v1212, %v1220
    %v1229 = vadd.f32 %v1213, %v1221
    %v1230 = vadd.f32 %v1214, %v1222
    %v1231 = vadd.f32 %v1215, %v1223
    %v1232 = vadd.f32 %v1216, %v1224
    %v1233 = vadd.f32 %v1217, %v1225
    %v1234 = vadd.f32 %v1218, %v1226
    %v1235 = vadd.f32 %v1227, %v1067
    %v1236 = vadd.f32 %v1228, %v1068
    %v1237 = vadd.f32 %v1229, %v1069
    %v1238 = vadd.f32 %v1230, %v1070
    %v1239 = vadd.f32 %v1231, %v1071
    %v1240 = vadd.f32 %v1232, %v1072
    %v1241 = vadd.f32 %v1233, %v1073
    %v1242 = vadd.f32 %v1234, %v1074
    %v1243 = vmul.f32 %v1067, %v1067
    %v1244 = vmul.f32 %v1068, %v1068
    %v1245 = vmul.f32 %v1069, %v1069
    %v1246 = vmul.f32 %v1070, %v1070
    %v1247 = vmul.f32 %v1071, %v1071
    %v1248 = vmul.f32 %v1072, %v1072
    %v1249 = vmul.f32 %v1073, %v1073
    %v1250 = vmul.f32 %v1074, %v1074
    %v1251 = vadd.f32 %v1243, %v1075
    %v1252 = vadd.f32 %v1244, %v1076
    %v1253 = vadd.f32 %v1245, %v1077
    %v1254 = vadd.f32 %v1246, %v1078
    %v1255 = vadd.f32 %v1247, %v1079
    %v1256 = vadd.f32 %v1248, %v1080
    %v1257 = vadd.f32 %v1249, %v1081
    %v1258 = vadd.f32 %v1250, %v1082
    %v1259 = vmul.f32 %v1123, %v1211
    %v1260 = vmul.f32 %v1124, %v1212
    %v1261 = vmul.f32 %v1125, %v1213
    %v1262 = vmul.f32 %v1126, %v1214
    %v1263 = vmul.f32 %v1127, %v1215
    %v1264 = vmul.f32 %v1128, %v1216
    %v1265 = vmul.f32 %v1129, %v1217
    %v1266 = vmul.f32 %v1130, %v1218
    %v1267 = vadd.f32 %v1259, %v1251
    %v1268 = vadd.f32 %v1260, %v1252
    %v1269 = vadd.f32 %v1261, %v1253
    %v1270 = vadd.f32 %v1262, %v1254
    %v1271 = vadd.f32 %v1263, %v1255
    %v1272 = vadd.f32 %v1264, %v1256
    %v1273 = vadd.f32 %v1265, %v1257
    %v1274 = vadd.f32 %v1266, %v1258
    %v1275 = vsub.f32 %v1043, %v1251
    %v1276 = vsub.f32 %v1044, %v1252
    %v1277 = vsub.f32 %v1045, %v1253
    %v1278 = vsub.f32 %v1046, %v1254
    %v1279 = vsub.f32 %v1047, %v1255
    %v1280 = vsub.f32 %v1048, %v1256
    %v1281 = vsub.f32 %v1049, %v1257
    %v1282 = vsub.f32 %v1050, %v1258
    %v1283 = vmul.f32 %v1203, %v1275
    %v1284 = vmul.f32 %v1204, %v1276
    %v1285 = vmul.f32 %v1205, %v1277
    %v1286 = vmul.f32 %v1206, %v1278
    %v1287 = vmul.f32 %v1207, %v1279
    %v1288 = vmul.f32 %v1208, %v1280
    %v1289 = vmul.f32 %v1209, %v1281
    %v1290 = vmul.f32 %v1210, %v1282
    %v1291 = vadd.f32 %v1267, %v1283
    %v1292 = vadd.f32 %v1268, %v1284
    %v1293 = vadd.f32 %v1269, %v1285
    %v1294 = vadd.f32 %v1270, %v1286
    %v1295 = vadd.f32 %v1271, %v1287
    %v1296 = vadd.f32 %v1272, %v1288
    %v1297 = vadd.f32 %v1273, %v1289
    %v1298 = vadd.f32 %v1274, %v1290
    %v1299 = vmul.f32 %v1235, %v1235
    %v1300 = vmul.f32 %v1236, %v1236
    %v1301 = vmul.f32 %v1237, %v1237
    %v1302 = vmul.f32 %v1238, %v1238
    %v1303 = vmul.f32 %v1239, %v1239
    %v1304 = vmul.f32 %v1240, %v1240
    %v1305 = vmul.f32 %v1241, %v1241
    %v1306 = vmul.f32 %v1242, %v1242
    %v1307 = vsub.f32 %v1291, %v1299
    %v1308 = vsub.f32 %v1292, %v1300
    %v1309 = vsub.f32 %v1293, %v1301
    %v1310 = vsub.f32 %v1294, %v1302
    %v1311 = vsub.f32 %v1295, %v1303
    %v1312 = vsub.f32 %v1296, %v1304
    %v1313 = vsub.f32 %v1297, %v1305
    %v1314 = vsub.f32 %v1298, %v1306
    %v1315 = vld [vmem:[#allocation2 + $0x6] sm:$0x1]
    %v1316 = vld [vmem:[#allocation2 + $0xe] sm:$0x1]
    %v1317 = vld [vmem:[#allocation2 + $0x16] sm:$0x1]
    %v1318 = vld [vmem:[#allocation2 + $0x1e] sm:$0x1]
    %v1319 = vld [vmem:[#allocation2 + $0x26] sm:$0x1]
    %v1320 = vld [vmem:[#allocation2 + $0x2e] sm:$0x1]
    %v1321 = vld [vmem:[#allocation2 + $0x36] sm:$0x1]
    %v1322 = vld [vmem:[#allocation2 + $0x3e] sm:$0x1]
    %v1323 = vld [vmem:[#allocation5 + $0x6] sm:$0x1]
    %v1324 = vld [vmem:[#allocation5 + $0xe] sm:$0x1]
    %v1325 = vld [vmem:[#allocation5 + $0x16] sm:$0x1]
    %v1326 = vld [vmem:[#allocation5 + $0x1e] sm:$0x1]
    %v1327 = vld [vmem:[#allocation5 + $0x26] sm:$0x1]
    %v1328 = vld [vmem:[#allocation5 + $0x2e] sm:$0x1]
    %v1329 = vld [vmem:[#allocation5 + $0x36] sm:$0x1]
    %v1330 = vld [vmem:[#allocation5 + $0x3e] sm:$0x1]
    %v1331 = vadd.f32 %v1307, %v1323
    %v1332 = vadd.f32 %v1308, %v1324
    %v1333 = vadd.f32 %v1309, %v1325
    %v1334 = vadd.f32 %v1310, %v1326
    %v1335 = vadd.f32 %v1311, %v1327
    %v1336 = vadd.f32 %v1312, %v1328
    %v1337 = vadd.f32 %v1313, %v1329
    %v1338 = vadd.f32 %v1314, %v1330
    %v1339 = vmax.f32 %v1331, 1e-10
    %v1340 = vmax.f32 %v1332, 1e-10
    %v1341 = vmax.f32 %v1333, 1e-10
    %v1342 = vmax.f32 %v1334, 1e-10
    %v1343 = vmax.f32 %v1335, 1e-10
    %v1344 = vmax.f32 %v1336, 1e-10
    %v1345 = vmax.f32 %v1337, 1e-10
    %v1346 = vmax.f32 %v1338, 1e-10
    %v1347 = vrsqrt.pop %v1339
    %v1348 = vrsqrt.pop %v1340
    %v1349 = vrsqrt.pop %v1341
    %v1350 = vrsqrt.pop %v1342
    %v1351 = vrsqrt.pop %v1343
    %v1352 = vrsqrt.pop %v1344
    %v1353 = vrsqrt.pop %v1345
    %v1354 = vrsqrt.pop %v1346
    %v1355 = vmul.f32 %v1339, %v1347
    %v1356 = vmul.f32 %v1340, %v1348
    %v1357 = vmul.f32 %v1341, %v1349
    %v1358 = vmul.f32 %v1342, %v1350
    %v1359 = vmul.f32 %v1343, %v1351
    %v1360 = vmul.f32 %v1344, %v1352
    %v1361 = vmul.f32 %v1345, %v1353
    %v1362 = vmul.f32 %v1346, %v1354
    %v1363 = vsub.f32 %v1235, %v1315
    %v1364 = vsub.f32 %v1236, %v1316
    %v1365 = vsub.f32 %v1237, %v1317
    %v1366 = vsub.f32 %v1238, %v1318
    %v1367 = vsub.f32 %v1239, %v1319
    %v1368 = vsub.f32 %v1240, %v1320
    %v1369 = vsub.f32 %v1241, %v1321
    %v1370 = vsub.f32 %v1242, %v1322
    %v1371 = vadd.f32 %v1235, %v1315
    %v1372 = vadd.f32 %v1236, %v1316
    %v1373 = vadd.f32 %v1237, %v1317
    %v1374 = vadd.f32 %v1238, %v1318
    %v1375 = vadd.f32 %v1239, %v1319
    %v1376 = vadd.f32 %v1240, %v1320
    %v1377 = vadd.f32 %v1241, %v1321
    %v1378 = vadd.f32 %v1242, %v1322
    %v1379 = vmul.f32 %v1363, %v1347
    %v1380 = vmul.f32 %v1364, %v1348
    %v1381 = vmul.f32 %v1365, %v1349
    %v1382 = vmul.f32 %v1366, %v1350
    %v1383 = vmul.f32 %v1367, %v1351
    %v1384 = vmul.f32 %v1368, %v1352
    %v1385 = vmul.f32 %v1369, %v1353
    %v1386 = vmul.f32 %v1370, %v1354
    %v1387 = vmul.f32 %v1379, %v1379
    %v1388 = vmul.f32 %v1380, %v1380
    %v1389 = vmul.f32 %v1381, %v1381
    %v1390 = vmul.f32 %v1382, %v1382
    %v1391 = vmul.f32 %v1383, %v1383
    %v1392 = vmul.f32 %v1384, %v1384
    %v1393 = vmul.f32 %v1385, %v1385
    %v1394 = vmul.f32 %v1386, %v1386
    %v1395 = vmul.f32 %v1387, -0.5
    %v1396 = vmul.f32 %v1388, -0.5
    %v1397 = vmul.f32 %v1389, -0.5
    %v1398 = vmul.f32 %v1390, -0.5
    %v1399 = vmul.f32 %v1391, -0.5
    %v1400 = vmul.f32 %v1392, -0.5
    %v1401 = vmul.f32 %v1393, -0.5
    %v1402 = vmul.f32 %v1394, -0.5
    %v1403 = vmul.f32 %v1395, 1.442695
    %v1404 = vpow.pop %v1403
    %v1405 = vmul.f32 %v1396, 1.442695
    %v1406 = vpow.pop %v1405
    %v1407 = vmul.f32 %v1397, 1.442695
    %v1408 = vpow.pop %v1407
    %v1409 = vmul.f32 %v1398, 1.442695
    %v1410 = vpow.pop %v1409
    %v1411 = vmul.f32 %v1399, 1.442695
    %v1412 = vpow.pop %v1411
    %v1413 = vmul.f32 %v1400, 1.442695
    %v1414 = vpow.pop %v1413
    %v1415 = vmul.f32 %v1401, 1.442695
    %v1416 = vpow.pop %v1415
    %v1417 = vmul.f32 %v1402, 1.442695
    %v1418 = vpow.pop %v1417
    %v1419 = vmul.f32 %v1404, 0.3989423
    %v1420 = vmul.f32 %v1406, 0.3989423
    %v1421 = vmul.f32 %v1408, 0.3989423
    %v1422 = vmul.f32 %v1410, 0.3989423
    %v1423 = vmul.f32 %v1412, 0.3989423
    %v1424 = vmul.f32 %v1414, 0.3989423
    %v1425 = vmul.f32 %v1416, 0.3989423
    %v1426 = vmul.f32 %v1418, 0.3989423
    %v1427 = vmul.f32 %v1379, 0.70710677
    %v1428 = vmul.f32 %v1380, 0.70710677
    %v1429 = vmul.f32 %v1381, 0.70710677
    %v1430 = vmul.f32 %v1382, 0.70710677
    %v1431 = vmul.f32 %v1383, 0.70710677
    %v1432 = vmul.f32 %v1384, 0.70710677
    %v1433 = vmul.f32 %v1385, 0.70710677
    %v1434 = vmul.f32 %v1386, 0.70710677
    %v1435 = verf.f32.pop %v1427
    %v1436 = verf.f32.pop %v1428
    %v1437 = verf.f32.pop %v1429
    %v1438 = verf.f32.pop %v1430
    %v1439 = verf.f32.pop %v1431
    %v1440 = verf.f32.pop %v1432
    %v1441 = verf.f32.pop %v1433
    %v1442 = verf.f32.pop %v1434
    %v1443 = vadd.f32 %v1435, 1.0
    %v1444 = vadd.f32 %v1436, 1.0
    %v1445 = vadd.f32 %v1437, 1.0
    %v1446 = vadd.f32 %v1438, 1.0
    %v1447 = vadd.f32 %v1439, 1.0
    %v1448 = vadd.f32 %v1440, 1.0
    %v1449 = vadd.f32 %v1441, 1.0
    %v1450 = vadd.f32 %v1442, 1.0
    %v1451 = vmul.f32 %v1443, 0.5
    %v1452 = vmul.f32 %v1444, 0.5
    %v1453 = vmul.f32 %v1445, 0.5
    %v1454 = vmul.f32 %v1446, 0.5
    %v1455 = vmul.f32 %v1447, 0.5
    %v1456 = vmul.f32 %v1448, 0.5
    %v1457 = vmul.f32 %v1449, 0.5
    %v1458 = vmul.f32 %v1450, 0.5
    %v1459 = vmul.f32 %v1355, %v1419
    %v1460 = vmul.f32 %v1356, %v1420
    %v1461 = vmul.f32 %v1357, %v1421
    %v1462 = vmul.f32 %v1358, %v1422
    %v1463 = vmul.f32 %v1359, %v1423
    %v1464 = vmul.f32 %v1360, %v1424
    %v1465 = vmul.f32 %v1361, %v1425
    %v1466 = vmul.f32 %v1362, %v1426
    %v1467 = vmul.f32 %v1363, %v1451
    %v1468 = vmul.f32 %v1364, %v1452
    %v1469 = vmul.f32 %v1365, %v1453
    %v1470 = vmul.f32 %v1366, %v1454
    %v1471 = vmul.f32 %v1367, %v1455
    %v1472 = vmul.f32 %v1368, %v1456
    %v1473 = vmul.f32 %v1369, %v1457
    %v1474 = vmul.f32 %v1370, %v1458
    %v1475 = vadd.f32 %v1459, %v1467
    %v1476 = vadd.f32 %v1460, %v1468
    %v1477 = vadd.f32 %v1461, %v1469
    %v1478 = vadd.f32 %v1462, %v1470
    %v1479 = vadd.f32 %v1463, %v1471
    %v1480 = vadd.f32 %v1464, %v1472
    %v1481 = vadd.f32 %v1465, %v1473
    %v1482 = vadd.f32 %v1466, %v1474
    %v1483 = vadd.f32 %v1475, %v1315
    %v1484 = vadd.f32 %v1476, %v1316
    %v1485 = vadd.f32 %v1477, %v1317
    %v1486 = vadd.f32 %v1478, %v1318
    %v1487 = vadd.f32 %v1479, %v1319
    %v1488 = vadd.f32 %v1480, %v1320
    %v1489 = vadd.f32 %v1481, %v1321
    %v1490 = vadd.f32 %v1482, %v1322
    %v1491 = vmul.f32 %v1315, %v1315
    %v1492 = vmul.f32 %v1316, %v1316
    %v1493 = vmul.f32 %v1317, %v1317
    %v1494 = vmul.f32 %v1318, %v1318
    %v1495 = vmul.f32 %v1319, %v1319
    %v1496 = vmul.f32 %v1320, %v1320
    %v1497 = vmul.f32 %v1321, %v1321
    %v1498 = vmul.f32 %v1322, %v1322
    %v1499 = vadd.f32 %v1491, %v1323
    %v1500 = vadd.f32 %v1492, %v1324
    %v1501 = vadd.f32 %v1493, %v1325
    %v1502 = vadd.f32 %v1494, %v1326
    %v1503 = vadd.f32 %v1495, %v1327
    %v1504 = vadd.f32 %v1496, %v1328
    %v1505 = vadd.f32 %v1497, %v1329
    %v1506 = vadd.f32 %v1498, %v1330
    %v1507 = vmul.f32 %v1371, %v1459
    %v1508 = vmul.f32 %v1372, %v1460
    %v1509 = vmul.f32 %v1373, %v1461
    %v1510 = vmul.f32 %v1374, %v1462
    %v1511 = vmul.f32 %v1375, %v1463
    %v1512 = vmul.f32 %v1376, %v1464
    %v1513 = vmul.f32 %v1377, %v1465
    %v1514 = vmul.f32 %v1378, %v1466
    %v1515 = vadd.f32 %v1507, %v1499
    %v1516 = vadd.f32 %v1508, %v1500
    %v1517 = vadd.f32 %v1509, %v1501
    %v1518 = vadd.f32 %v1510, %v1502
    %v1519 = vadd.f32 %v1511, %v1503
    %v1520 = vadd.f32 %v1512, %v1504
    %v1521 = vadd.f32 %v1513, %v1505
    %v1522 = vadd.f32 %v1514, %v1506
    %v1523 = vsub.f32 %v1291, %v1499
    %v1524 = vsub.f32 %v1292, %v1500
    %v1525 = vsub.f32 %v1293, %v1501
    %v1526 = vsub.f32 %v1294, %v1502
    %v1527 = vsub.f32 %v1295, %v1503
    %v1528 = vsub.f32 %v1296, %v1504
    %v1529 = vsub.f32 %v1297, %v1505
    %v1530 = vsub.f32 %v1298, %v1506
    %v1531 = vmul.f32 %v1451, %v1523
    %v1532 = vmul.f32 %v1452, %v1524
    %v1533 = vmul.f32 %v1453, %v1525
    %v1534 = vmul.f32 %v1454, %v1526
    %v1535 = vmul.f32 %v1455, %v1527
    %v1536 = vmul.f32 %v1456, %v1528
    %v1537 = vmul.f32 %v1457, %v1529
    %v1538 = vmul.f32 %v1458, %v1530
    %v1539 = vadd.f32 %v1515, %v1531
    %v1540 = vadd.f32 %v1516, %v1532
    %v1541 = vadd.f32 %v1517, %v1533
    %v1542 = vadd.f32 %v1518, %v1534
    %v1543 = vadd.f32 %v1519, %v1535
    %v1544 = vadd.f32 %v1520, %v1536
    %v1545 = vadd.f32 %v1521, %v1537
    %v1546 = vadd.f32 %v1522, %v1538
    %v1547 = vmul.f32 %v1483, %v1483
    %v1548 = vmul.f32 %v1484, %v1484
    %v1549 = vmul.f32 %v1485, %v1485
    %v1550 = vmul.f32 %v1486, %v1486
    %v1551 = vmul.f32 %v1487, %v1487
    %v1552 = vmul.f32 %v1488, %v1488
    %v1553 = vmul.f32 %v1489, %v1489
    %v1554 = vmul.f32 %v1490, %v1490
    %v1555 = vsub.f32 %v1539, %v1547
    %v1556 = vsub.f32 %v1540, %v1548
    %v1557 = vsub.f32 %v1541, %v1549
    %v1558 = vsub.f32 %v1542, %v1550
    %v1559 = vsub.f32 %v1543, %v1551
    %v1560 = vsub.f32 %v1544, %v1552
    %v1561 = vsub.f32 %v1545, %v1553
    %v1562 = vsub.f32 %v1546, %v1554
    %v1563 = vld [vmem:[#allocation2 + $0x7] sm:$0x1]
    %v1564 = vld [vmem:[#allocation2 + $0xf] sm:$0x1]
    %v1565 = vld [vmem:[#allocation2 + $0x17] sm:$0x1]
    %v1566 = vld [vmem:[#allocation2 + $0x1f] sm:$0x1]
    %v1567 = vld [vmem:[#allocation2 + $0x27] sm:$0x1]
    %v1568 = vld [vmem:[#allocation2 + $0x2f] sm:$0x1]
    %v1569 = vld [vmem:[#allocation2 + $0x37] sm:$0x1]
    %v1570 = vld [vmem:[#allocation2 + $0x3f] sm:$0x1]
    %v1571 = vld [vmem:[#allocation5 + $0x7] sm:$0x1]
    %v1572 = vld [vmem:[#allocation5 + $0xf] sm:$0x1]
    %v1573 = vld [vmem:[#allocation5 + $0x17] sm:$0x1]
    %v1574 = vld [vmem:[#allocation5 + $0x1f] sm:$0x1]
    %v1575 = vld [vmem:[#allocation5 + $0x27] sm:$0x1]
    %v1576 = vld [vmem:[#allocation5 + $0x2f] sm:$0x1]
    %v1577 = vld [vmem:[#allocation5 + $0x37] sm:$0x1]
    %v1578 = vld [vmem:[#allocation5 + $0x3f] sm:$0x1]
    %v1579 = vadd.f32 %v1555, %v1571
    %v1580 = vadd.f32 %v1556, %v1572
    %v1581 = vadd.f32 %v1557, %v1573
    %v1582 = vadd.f32 %v1558, %v1574
    %v1583 = vadd.f32 %v1559, %v1575
    %v1584 = vadd.f32 %v1560, %v1576
    %v1585 = vadd.f32 %v1561, %v1577
    %v1586 = vadd.f32 %v1562, %v1578
    %v1587 = vmax.f32 %v1579, 1e-10
    %v1588 = vmax.f32 %v1580, 1e-10
    %v1589 = vmax.f32 %v1581, 1e-10
    %v1590 = vmax.f32 %v1582, 1e-10
    %v1591 = vmax.f32 %v1583, 1e-10
    %v1592 = vmax.f32 %v1584, 1e-10
    %v1593 = vmax.f32 %v1585, 1e-10
    %v1594 = vmax.f32 %v1586, 1e-10
    %v1595 = vrsqrt.pop %v1587
    %v1596 = vrsqrt.pop %v1588
    %v1597 = vrsqrt.pop %v1589
    %v1598 = vrsqrt.pop %v1590
    %v1599 = vrsqrt.pop %v1591
    %v1600 = vrsqrt.pop %v1592
    %v1601 = vrsqrt.pop %v1593
    %v1602 = vrsqrt.pop %v1594
    %v1603 = vmul.f32 %v1587, %v1595
    %v1604 = vmul.f32 %v1588, %v1596
    %v1605 = vmul.f32 %v1589, %v1597
    %v1606 = vmul.f32 %v1590, %v1598
    %v1607 = vmul.f32 %v1591, %v1599
    %v1608 = vmul.f32 %v1592, %v1600
    %v1609 = vmul.f32 %v1593, %v1601
    %v1610 = vmul.f32 %v1594, %v1602
    %v1611 = vsub.f32 %v1483, %v1563
    %v1612 = vsub.f32 %v1484, %v1564
    %v1613 = vsub.f32 %v1485, %v1565
    %v1614 = vsub.f32 %v1486, %v1566
    %v1615 = vsub.f32 %v1487, %v1567
    %v1616 = vsub.f32 %v1488, %v1568
    %v1617 = vsub.f32 %v1489, %v1569
    %v1618 = vsub.f32 %v1490, %v1570
    %v1619 = vadd.f32 %v1483, %v1563
    %v1620 = vadd.f32 %v1484, %v1564
    %v1621 = vadd.f32 %v1485, %v1565
    %v1622 = vadd.f32 %v1486, %v1566
    %v1623 = vadd.f32 %v1487, %v1567
    %v1624 = vadd.f32 %v1488, %v1568
    %v1625 = vadd.f32 %v1489, %v1569
    %v1626 = vadd.f32 %v1490, %v1570
    %v1627 = vmul.f32 %v1611, %v1595
    %v1628 = vmul.f32 %v1612, %v1596
    %v1629 = vmul.f32 %v1613, %v1597
    %v1630 = vmul.f32 %v1614, %v1598
    %v1631 = vmul.f32 %v1615, %v1599
    %v1632 = vmul.f32 %v1616, %v1600
    %v1633 = vmul.f32 %v1617, %v1601
    %v1634 = vmul.f32 %v1618, %v1602
    %v1635 = vmul.f32 %v1627, %v1627
    %v1636 = vmul.f32 %v1628, %v1628
    %v1637 = vmul.f32 %v1629, %v1629
    %v1638 = vmul.f32 %v1630, %v1630
    %v1639 = vmul.f32 %v1631, %v1631
    %v1640 = vmul.f32 %v1632, %v1632
    %v1641 = vmul.f32 %v1633, %v1633
    %v1642 = vmul.f32 %v1634, %v1634
    %v1643 = vmul.f32 %v1635, -0.5
    %v1644 = vmul.f32 %v1636, -0.5
    %v1645 = vmul.f32 %v1637, -0.5
    %v1646 = vmul.f32 %v1638, -0.5
    %v1647 = vmul.f32 %v1639, -0.5
    %v1648 = vmul.f32 %v1640, -0.5
    %v1649 = vmul.f32 %v1641, -0.5
    %v1650 = vmul.f32 %v1642, -0.5
    %v1651 = vmul.f32 %v1643, 1.442695
    %v1652 = vpow.pop %v1651
    %v1653 = vmul.f32 %v1644, 1.442695
    %v1654 = vpow.pop %v1653
    %v1655 = vmul.f32 %v1645, 1.442695
    %v1656 = vpow.pop %v1655
    %v1657 = vmul.f32 %v1646, 1.442695
    %v1658 = vpow.pop %v1657
    %v1659 = vmul.f32 %v1647, 1.442695
    %v1660 = vpow.pop %v1659
    %v1661 = vmul.f32 %v1648, 1.442695
    %v1662 = vpow.pop %v1661
    %v1663 = vmul.f32 %v1649, 1.442695
    %v1664 = vpow.pop %v1663
    %v1665 = vmul.f32 %v1650, 1.442695
    %v1666 = vpow.pop %v1665
    %v1667 = vmul.f32 %v1652, 0.3989423
    %v1668 = vmul.f32 %v1654, 0.3989423
    %v1669 = vmul.f32 %v1656, 0.3989423
    %v1670 = vmul.f32 %v1658, 0.3989423
    %v1671 = vmul.f32 %v1660, 0.3989423
    %v1672 = vmul.f32 %v1662, 0.3989423
    %v1673 = vmul.f32 %v1664, 0.3989423
    %v1674 = vmul.f32 %v1666, 0.3989423
    %v1675 = vmul.f32 %v1627, 0.70710677
    %v1676 = vmul.f32 %v1628, 0.70710677
    %v1677 = vmul.f32 %v1629, 0.70710677
    %v1678 = vmul.f32 %v1630, 0.70710677
    %v1679 = vmul.f32 %v1631, 0.70710677
    %v1680 = vmul.f32 %v1632, 0.70710677
    %v1681 = vmul.f32 %v1633, 0.70710677
    %v1682 = vmul.f32 %v1634, 0.70710677
    %v1683 = verf.f32.pop %v1675
    %v1684 = verf.f32.pop %v1676
    %v1685 = verf.f32.pop %v1677
    %v1686 = verf.f32.pop %v1678
    %v1687 = verf.f32.pop %v1679
    %v1688 = verf.f32.pop %v1680
    %v1689 = verf.f32.pop %v1681
    %v1690 = verf.f32.pop %v1682
    %v1691 = vadd.f32 %v1683, 1.0
    %v1692 = vadd.f32 %v1684, 1.0
    %v1693 = vadd.f32 %v1685, 1.0
    %v1694 = vadd.f32 %v1686, 1.0
    %v1695 = vadd.f32 %v1687, 1.0
    %v1696 = vadd.f32 %v1688, 1.0
    %v1697 = vadd.f32 %v1689, 1.0
    %v1698 = vadd.f32 %v1690, 1.0
    %v1699 = vmul.f32 %v1691, 0.5
    %v1700 = vmul.f32 %v1692, 0.5
    %v1701 = vmul.f32 %v1693, 0.5
    %v1702 = vmul.f32 %v1694, 0.5
    %v1703 = vmul.f32 %v1695, 0.5
    %v1704 = vmul.f32 %v1696, 0.5
    %v1705 = vmul.f32 %v1697, 0.5
    %v1706 = vmul.f32 %v1698, 0.5
    %v1707 = vmul.f32 %v1603, %v1667
    %v1708 = vmul.f32 %v1604, %v1668
    %v1709 = vmul.f32 %v1605, %v1669
    %v1710 = vmul.f32 %v1606, %v1670
    %v1711 = vmul.f32 %v1607, %v1671
    %v1712 = vmul.f32 %v1608, %v1672
    %v1713 = vmul.f32 %v1609, %v1673
    %v1714 = vmul.f32 %v1610, %v1674
    %v1715 = vmul.f32 %v1611, %v1699
    %v1716 = vmul.f32 %v1612, %v1700
    %v1717 = vmul.f32 %v1613, %v1701
    %v1718 = vmul.f32 %v1614, %v1702
    %v1719 = vmul.f32 %v1615, %v1703
    %v1720 = vmul.f32 %v1616, %v1704
    %v1721 = vmul.f32 %v1617, %v1705
    %v1722 = vmul.f32 %v1618, %v1706
    %v1723 = vadd.f32 %v1707, %v1715
    %v1724 = vadd.f32 %v1708, %v1716
    %v1725 = vadd.f32 %v1709, %v1717
    %v1726 = vadd.f32 %v1710, %v1718
    %v1727 = vadd.f32 %v1711, %v1719
    %v1728 = vadd.f32 %v1712, %v1720
    %v1729 = vadd.f32 %v1713, %v1721
    %v1730 = vadd.f32 %v1714, %v1722
    %v1731 = vadd.f32 %v1723, %v1563
    %v1732 = vadd.f32 %v1724, %v1564
    %v1733 = vadd.f32 %v1725, %v1565
    %v1734 = vadd.f32 %v1726, %v1566
    %v1735 = vadd.f32 %v1727, %v1567
    %v1736 = vadd.f32 %v1728, %v1568
    %v1737 = vadd.f32 %v1729, %v1569
    %v1738 = vadd.f32 %v1730, %v1570
    %v1739 = vmul.f32 %v1563, %v1563
    %v1740 = vmul.f32 %v1564, %v1564
    %v1741 = vmul.f32 %v1565, %v1565
    %v1742 = vmul.f32 %v1566, %v1566
    %v1743 = vmul.f32 %v1567, %v1567
    %v1744 = vmul.f32 %v1568, %v1568
    %v1745 = vmul.f32 %v1569, %v1569
    %v1746 = vmul.f32 %v1570, %v1570
    %v1747 = vadd.f32 %v1739, %v1571
    %v1748 = vadd.f32 %v1740, %v1572
    %v1749 = vadd.f32 %v1741, %v1573
    %v1750 = vadd.f32 %v1742, %v1574
    %v1751 = vadd.f32 %v1743, %v1575
    %v1752 = vadd.f32 %v1744, %v1576
    %v1753 = vadd.f32 %v1745, %v1577
    %v1754 = vadd.f32 %v1746, %v1578
    %v1755 = vmul.f32 %v1619, %v1707
    %v1756 = vmul.f32 %v1620, %v1708
    %v1757 = vmul.f32 %v1621, %v1709
    %v1758 = vmul.f32 %v1622, %v1710
    %v1759 = vmul.f32 %v1623, %v1711
    %v1760 = vmul.f32 %v1624, %v1712
    %v1761 = vmul.f32 %v1625, %v1713
    %v1762 = vmul.f32 %v1626, %v1714
    %v1763 = vadd.f32 %v1755, %v1747
    %v1764 = vadd.f32 %v1756, %v1748
    %v1765 = vadd.f32 %v1757, %v1749
    %v1766 = vadd.f32 %v1758, %v1750
    %v1767 = vadd.f32 %v1759, %v1751
    %v1768 = vadd.f32 %v1760, %v1752
    %v1769 = vadd.f32 %v1761, %v1753
    %v1770 = vadd.f32 %v1762, %v1754
    %v1771 = vsub.f32 %v1539, %v1747
    %v1772 = vsub.f32 %v1540, %v1748
    %v1773 = vsub.f32 %v1541, %v1749
    %v1774 = vsub.f32 %v1542, %v1750
    %v1775 = vsub.f32 %v1543, %v1751
    %v1776 = vsub.f32 %v1544, %v1752
    %v1777 = vsub.f32 %v1545, %v1753
    %v1778 = vsub.f32 %v1546, %v1754
    %v1779 = vmul.f32 %v1699, %v1771
    %v1780 = vmul.f32 %v1700, %v1772
    %v1781 = vmul.f32 %v1701, %v1773
    %v1782 = vmul.f32 %v1702, %v1774
    %v1783 = vmul.f32 %v1703, %v1775
    %v1784 = vmul.f32 %v1704, %v1776
    %v1785 = vmul.f32 %v1705, %v1777
    %v1786 = vmul.f32 %v1706, %v1778
    %v1787 = vadd.f32 %v1763, %v1779
    %v1788 = vadd.f32 %v1764, %v1780
    %v1789 = vadd.f32 %v1765, %v1781
    %v1790 = vadd.f32 %v1766, %v1782
    %v1791 = vadd.f32 %v1767, %v1783
    %v1792 = vadd.f32 %v1768, %v1784
    %v1793 = vadd.f32 %v1769, %v1785
    %v1794 = vadd.f32 %v1770, %v1786
    %v1795 = vmul.f32 %v1731, %v1731
    %v1796 = vmul.f32 %v1732, %v1732
    %v1797 = vmul.f32 %v1733, %v1733
    %v1798 = vmul.f32 %v1734, %v1734
    %v1799 = vmul.f32 %v1735, %v1735
    %v1800 = vmul.f32 %v1736, %v1736
    %v1801 = vmul.f32 %v1737, %v1737
    %v1802 = vmul.f32 %v1738, %v1738
    %v1803 = vsub.f32 %v1787, %v1795
    %v1804 = vsub.f32 %v1788, %v1796
    %v1805 = vsub.f32 %v1789, %v1797
    %v1806 = vsub.f32 %v1790, %v1798
    %v1807 = vsub.f32 %v1791, %v1799
    %v1808 = vsub.f32 %v1792, %v1800
    %v1809 = vsub.f32 %v1793, %v1801
    %v1810 = vsub.f32 %v1794, %v1802
    %v1819 = vrot.slane %v1732, 7
    %vm1820 = vcmask 1041409
    %v1821 = vsel %vm1820, %v1819, %v1731
    %v1822 = vrot.slane %v1733, 6
    %vm1823 = vcmask 1042434
    %v1824 = vsel %vm1823, %v1822, %v1821
    %v1825 = vrot.slane %v1734, 5
    %vm1826 = vcmask 1043459
    %v1827 = vsel %vm1826, %v1825, %v1824
    %v1828 = vrot.slane %v1735, 4
    %vm1829 = vcmask 1044484
    %v1830 = vsel %vm1829, %v1828, %v1827
    %v1831 = vrot.slane %v1736, 3
    %vm1832 = vcmask 1045509
    %v1833 = vsel %vm1832, %v1831, %v1830
    %v1834 = vrot.slane %v1737, 2
    %vm1835 = vcmask 1046534
    %v1836 = vsel %vm1835, %v1834, %v1833
    %v1837 = vrot.slane %v1738, 1
    %vm1838 = vcmask 1047559
    %v1839 = vsel %vm1838, %v1837, %v1836
    %vm1841 = vcmask 523264
    %1842 = vst.msk [vmem:[#allocation7] sm:$0xff] %vm1841, %v1839
    %v1851 = vrot.slane %v1804, 7
    %v1852 = vsel %vm1820, %v1851, %v1803
    %v1853 = vrot.slane %v1805, 6
    %v1854 = vsel %vm1823, %v1853, %v1852
    %v1855 = vrot.slane %v1806, 5
    %v1856 = vsel %vm1826, %v1855, %v1854
    %v1857 = vrot.slane %v1807, 4
    %v1858 = vsel %vm1829, %v1857, %v1856
    %v1859 = vrot.slane %v1808, 3
    %v1860 = vsel %vm1832, %v1859, %v1858
    %v1861 = vrot.slane %v1809, 2
    %v1862 = vsel %vm1835, %v1861, %v1860
    %v1863 = vrot.slane %v1810, 1
    %v1864 = vsel %vm1838, %v1863, %v1862
    %1866 = vst.msk [vmem:[#allocation8] sm:$0xff] %vm1841, %v1864
    // Predicated region
    $region18: #{tpu_custom_call.1} parent=1 // pred_check
      _
    $region19: #{tpu_custom_call.1} parent=1 // pred_check_branch
      %1868 = sbr.rel (0) target = $region21
    $region20: #{tpu_custom_call.1} parent=1 // pred_region
      %s1870 = ssub.s32 128, 128
      %1871 = vsyncadd [#allocation4], %s1870
      %s1873 = sshll.u32 [#allocation7], 4
      %s1874 = int_to_ptr.vmem [resolvable:$true] %s1873
      %1876 = dma.vmem_to_hbm [thread:$0]  %s1874, 128, %s2, [#allocation4]
    $region21: #{tpu_custom_call.1} parent=1 // pred_fallthru
      _
    // Predicated region
    $region22: #{tpu_custom_call.1} parent=1 // pred_check
      _
    $region23: #{tpu_custom_call.1} parent=1 // pred_check_branch
      %1878 = sbr.rel (0) target = $region25
    $region24: #{tpu_custom_call.1} parent=1 // pred_region
      %s1880 = ssub.s32 128, 128
      %1881 = vsyncadd [#allocation9], %s1880
      %s1883 = sshll.u32 [#allocation8], 4
      %s1884 = int_to_ptr.vmem [resolvable:$true] %s1883
      %1886 = dma.vmem_to_hbm [thread:$0]  %s1884, 128, %s3, [#allocation9]
    $region25: #{tpu_custom_call.1} parent=1 // pred_fallthru
      _
    // Predicated region
    $region26: #{tpu_custom_call.1} parent=1 // pred_check
      _
    $region27: #{tpu_custom_call.1} parent=1 // pred_check_branch
      %1888 = sbr.rel (0) target = $region29
    $region28: #{tpu_custom_call.1} parent=1 // pred_region
      %1889 = dma.done [#allocation4], 128
    $region29: #{tpu_custom_call.1} parent=1 // pred_fallthru
      _
    // Predicated region
    $region30: #{tpu_custom_call.1} parent=1 // pred_check
      _
    $region31: #{tpu_custom_call.1} parent=1 // pred_check_branch
      %1891 = sbr.rel (0) target = $region33
    $region32: #{tpu_custom_call.1} parent=1 // pred_region
      %1892 = dma.done [#allocation9], 128
    $region33: #{tpu_custom_call.1} parent=1 // pred_fallthru
      _
    %1893 = vsyncpa [#allocation3], 1
    %1894 = vsyncpa [#allocation6], 1
    %1895 = vsyncpa [#allocation4], 1
    %1896 = vsyncpa [#allocation9], 1

</llo_original>
